<compile_context>
chip_gen: v6e
topology: v6e:2x2x1
jax: 0.10.0
libtpu: 0.0.40
codegen_flags: <defaults>
</compile_context>

<pallas_src>
import functools

import jax
import jax.numpy as jnp
from jax.experimental import pallas as pl
from jax.experimental.pallas import tpu as pltpu

PATCH = 8        # ImgToFeature downsamples by 8 (Block gets img_size // 8)
N_BLOCKS = 5
LANE = 128
ROW_ALIGN = 16   # bf16 packs 16 rows per vreg sublane group


def _round_up(v, m):
    return ((v + m - 1) // m) * m


def _cdiv(a, b):
    return (a + b - 1) // b


def _pad_axis(a, target, axis):
    pad = target - a.shape[axis]
    if pad == 0:
        return a
    widths = [(0, 0)] * a.ndim
    widths[axis] = (0, pad)
    return jnp.pad(a, widths)


@functools.lru_cache(maxsize=None)
def _single_buffer_supported():
    """Eagerly probe whether pipeline_mode=pl.Buffered(1) compiles on this JAX/TPU."""
    def k(x_ref, o_ref):
        o_ref[...] = x_ref[...] + 1.0
    try:
        with jax.ensure_compile_time_eval():
            x = jnp.zeros((ROW_ALIGN, LANE), jnp.float32)
            y = pl.pallas_call(
                k,
                out_shape=jax.ShapeDtypeStruct((ROW_ALIGN, LANE), jnp.float32),
                grid=(2,),
                in_specs=[pl.BlockSpec((ROW_ALIGN, LANE), lambda i: (0, 0),
                                       pipeline_mode=pl.Buffered(1))],
                out_specs=pl.BlockSpec((ROW_ALIGN, LANE), lambda i: (0, 0)),
            )(x)
            jax.block_until_ready(y)
        return True
    except Exception:
        return False


# ------------------------------ fused kernels ------------------------------- #

def _decoder_kernel_resident(x_ref, ew_ref, eb_ref, w1_ref, b1_ref, w2_ref,
                             b2_ref, uw_ref, ub_ref, o_ref):
    """Embed -> 5x residual FFN blocks -> unembed, all weights resident."""
    # ImgToFeature: patch-embed matmul (f32 accumulator kept live across blocks)
    feats = jnp.dot(x_ref[...], ew_ref[...],
                    preferred_element_type=jnp.float32) + eb_ref[...]

    # 5 residual FFN blocks — bf16 MXU inputs, f32 accumulation + residual.
    for i in range(N_BLOCKS):
        xb = feats.astype(jnp.bfloat16)
        h = jnp.dot(xb, w1_ref[i], preferred_element_type=jnp.float32) + b1_ref[i]
        # NOTE: tanh-approx GELU; PyTorch nn.GELU() default is exact erf
        # (small systematic difference, kept for lowering safety on all chips).
        h = jax.nn.gelu(h).astype(jnp.bfloat16)
        y = jnp.dot(h, w2_ref[i], preferred_element_type=jnp.float32) + b2_ref[i]
        feats = feats + y

    # FeatureToImg: 1x1 conv (matmul); single down-cast at the store.
    out = jnp.dot(feats.astype(jnp.bfloat16), uw_ref[...],
                  preferred_element_type=jnp.float32) + ub_ref[...]
    o_ref[...] = out.astype(o_ref.dtype)


def _decoder_kernel_streamed(x_ref, ew_ref, eb_ref, w1_ref, b1_ref, w2_ref,
                             b2_ref, uw_ref, ub_ref, o_ref, feats_ref):
    """Same math, but one grid step per FFN block: w1/w2 stream from HBM while
    the activation lives in a VMEM scratch accumulator (for large embedding_dim
    on 64 MiB-VMEM chips)."""
    j = pl.program_id(1)

    @pl.when(j == 0)
    def _():
        feats_ref[...] = (jnp.dot(x_ref[...], ew_ref[...],
                                  preferred_element_type=jnp.float32)
                          + eb_ref[...])

    xb = feats_ref[...].astype(jnp.bfloat16)
    h = jnp.dot(xb, w1_ref[0], preferred_element_type=jnp.float32) + b1_ref[0]
    h = jax.nn.gelu(h).astype(jnp.bfloat16)
    y = jnp.dot(h, w2_ref[0], preferred_element_type=jnp.float32) + b2_ref[0]
    feats_ref[...] = feats_ref[...] + y

    @pl.when(j == pl.num_programs(1) - 1)
    def _():
        out = (jnp.dot(feats_ref[...].astype(jnp.bfloat16), uw_ref[...],
                       preferred_element_type=jnp.float32) + ub_ref[...])
        o_ref[...] = out.astype(o_ref.dtype)


# ------------------------- parameters (deterministic) ----------------------- #

def init_decoder_params(key, in_channels, embedding_dim):
    D = embedding_dim
    K = in_channels * PATCH * PATCH
    Hd = 4 * D
    keys = jax.random.split(key, 2 + 2 * N_BLOCKS)

    def w(k, shape):
        return (0.02 * jax.random.normal(k, shape)).astype(jnp.float32)

    params = {
        # ImgToFeature: Conv2d(in_ch, D, kernel=8, stride=8) flattened to (K, D)
        "embed_w": w(keys[0], (K, D)),
        "embed_b": jnp.zeros((1, D), jnp.float32),
        # FeatureToImg: Conv2d(D, in_ch*64, kernel=1) + PixelShuffle(8)
        "unembed_w": w(keys[1], (D, K)),
        "unembed_b": jnp.zeros((1, K), jnp.float32),
        "blocks": [],
    }
    for i in range(N_BLOCKS):
        params["blocks"].append({
            "w1": w(keys[2 + 2 * i], (D, Hd)),
            "b1": jnp.zeros((1, Hd), jnp.float32),
            "w2": w(keys[3 + 2 * i], (Hd, D)),
            "b2": jnp.zeros((1, D), jnp.float32),
        })
    return params


# --------------------------------- forward ---------------------------------- #

def decoder_forward(params, x, *, tile_rows=512, stream_block_weights=None):
    """x: (B, C, H, W) float32 (NCHW, as in PyTorch). Returns (B, C, H, W)."""
    B, C, H, W = x.shape
    hh, ww = H // PATCH, W // PATCH
    N = B * hh * ww
    K = C * PATCH * PATCH
    D = params["embed_w"].shape[1]
    Hd = 4 * D

    # Lane-dense padded channel dims (zero padding is a mathematical no-op).
    Kp = _round_up(K, LANE)
    Dp = _round_up(D, LANE)
    Hp = _round_up(Hd, LANE)

    # --- generation-aware VMEM budget ---------------------------------------
    try:
        vmem_cap = int(pltpu.get_tpu_info().vmem_capacity_bytes)
    except Exception:
        vmem_cap = 64 << 20                       # conservative (valid on v7x)
    vmem_budget = int(vmem_cap * 0.85)            # headroom for compiler scratch

    single_buf = _single_buffer_supported()
    w_mult = 1 if single_buf else 2               # weight-buffer multiplicity

    bf16_const = 2 * (Kp * Dp + Dp * Kp)                     # embed + unembed
    bf16_ffn = 2 * N_BLOCKS * 2 * Dp * Hp                    # 5 x (w1 + w2)
    bias_bytes = 4 * (Dp + Kp + N_BLOCKS * (Hp + Dp))
    resident_w_vmem = w_mult * (bf16_const + bf16_ffn + bias_bytes)
    streamed_w_vmem = (w_mult * (bf16_const + 4 * (Dp + Kp))
                       + 2 * (2 * (2 * Dp * Hp) + 4 * (Hp + Dp)))

    # Per-row live bytes: dbl-buffered bf16 input tile, dbl-buffered f32 output
    # tile, f32 unembed temp, f32 feats + hidden, their bf16 copies.
    per_row = 2 * 2 * Kp + 2 * 4 * Kp + 4 * Kp + 6 * (Dp + Hp)

    if stream_block_weights is None:
        stream_block_weights = (
            resident_w_vmem + ROW_ALIGN * per_row + (4 << 20) > vmem_budget)
    w_vmem = streamed_w_vmem if stream_block_weights else resident_w_vmem

    # --- row tile: as large as the budget allows, >= 2 grid steps ------------
    n_al = _round_up(max(N, ROW_ALIGN), ROW_ALIGN)
    avail = max(vmem_budget - w_vmem - (4 << 20), ROW_ALIGN * per_row)
    tile_cap = max(ROW_ALIGN, (avail // per_row) // ROW_ALIGN * ROW_ALIGN)
    tile_n = min(tile_rows, tile_cap, n_al)
    g = _cdiv(n_al, tile_n)
    if g < 2 and n_al >= 2 * ROW_ALIGN:
        g = 2                       # feed both TensorCores / enable pipelining
    tile_n = _round_up(_cdiv(n_al, g), ROW_ALIGN)   # minimise last-tile padding
    N_pad = g * tile_n

    # --- pack / pad / cast parameters (plain XLA glue, folded under jit) -----
    ew = _pad_axis(_pad_axis(params["embed_w"], Kp, 0), Dp, 1).astype(jnp.bfloat16)
    eb = _pad_axis(params["embed_b"], Dp, 1)
    w1 = jnp.stack([b["w1"] for b in params["blocks"]])            # (5, D, 4D)
    b1 = jnp.stack([b["b1"] for b in params["blocks"]])            # (5, 1, 4D)
    w2 = jnp.stack([b["w2"] for b in params["blocks"]])            # (5, 4D, D)
    b2 = jnp.stack([b["b2"] for b in params["blocks"]])            # (5, 1, D)
    w1 = _pad_axis(_pad_axis(w1, Dp, 1), Hp, 2).astype(jnp.bfloat16)
    b1 = _pad_axis(b1, Hp, 2)
    w2 = _pad_axis(_pad_axis(w2, Hp, 1), Dp, 2).astype(jnp.bfloat16)
    b2 = _pad_axis(b2, Dp, 2)
    uw = _pad_axis(_pad_axis(params["unembed_w"], Dp, 0), Kp, 1).astype(jnp.bfloat16)
    ub = _pad_axis(params["unembed_b"], Kp, 1)

    # --- img2feature front-end: patchify in bf16 (== Conv2d k=8 s=8 input) ---
    patches = x.astype(jnp.bfloat16).reshape(B, C, hh, PATCH, ww, PATCH)
    patches = patches.transpose(0, 2, 4, 1, 3, 5).reshape(N, K)
    patches = _pad_axis(_pad_axis(patches, N_pad, 0), Kp, 1)

    # --- cost / VMEM bookkeeping ---------------------------------------------
    flops = 2 * N_pad * (Kp * Dp + N_BLOCKS * 2 * Dp * Hp + Dp * Kp)
    weight_hbm = (bf16_const + bias_bytes
                  + (bf16_ffn * g if stream_block_weights else bf16_ffn))
    cost = pl.CostEstimate(
        flops=flops,
        transcendentals=N_pad * N_BLOCKS * Hp,
        bytes_accessed=2 * N_pad * Kp + 4 * N_pad * Kp + weight_hbm,
    )
    vmem_est = w_vmem + tile_n * per_row
    vmem_limit = int(min(max(vmem_est + (8 << 20), 32 << 20), vmem_budget))

    wmode = {"pipeline_mode": pl.Buffered(1)} if single_buf else {}

    if not stream_block_weights:
        grid = (g,)
        kernel = _decoder_kernel_resident
        in_specs = [
            pl.BlockSpec((tile_n, Kp), lambda i: (i, 0)),                    # patches
            pl.BlockSpec((Kp, Dp), lambda i: (0, 0), **wmode),               # embed_w
            pl.BlockSpec((1, Dp), lambda i: (0, 0), **wmode),                # embed_b
            pl.BlockSpec((N_BLOCKS, Dp, Hp), lambda i: (0, 0, 0), **wmode),  # w1
            pl.BlockSpec((N_BLOCKS, 1, Hp), lambda i: (0, 0, 0), **wmode),   # b1
            pl.BlockSpec((N_BLOCKS, Hp, Dp), lambda i: (0, 0, 0), **wmode),  # w2
            pl.BlockSpec((N_BLOCKS, 1, Dp), lambda i: (0, 0, 0), **wmode),   # b2
            pl.BlockSpec((Dp, Kp), lambda i: (0, 0), **wmode),               # unembed_w
            pl.BlockSpec((1, Kp), lambda i: (0, 0), **wmode),                # unembed_b
        ]
        out_specs = pl.BlockSpec((tile_n, Kp), lambda i: (i, 0))
        scratch = []
        dims = ("parallel",)
    else:
        grid = (g, N_BLOCKS)
        kernel = _decoder_kernel_streamed
        in_specs = [
            pl.BlockSpec((tile_n, Kp), lambda i, j: (i, 0)),                 # patches
            pl.BlockSpec((Kp, Dp), lambda i, j: (0, 0), **wmode),            # embed_w
            pl.BlockSpec((1, Dp), lambda i, j: (0, 0), **wmode),             # embed_b
            pl.BlockSpec((1, Dp, Hp), lambda i, j: (j, 0, 0)),               # w1 (streamed)
            pl.BlockSpec((1, 1, Hp), lambda i, j: (j, 0, 0)),                # b1
            pl.BlockSpec((1, Hp, Dp), lambda i, j: (j, 0, 0)),               # w2 (streamed)
            pl.BlockSpec((1, 1, Dp), lambda i, j: (j, 0, 0)),                # b2
            pl.BlockSpec((Dp, Kp), lambda i, j: (0, 0), **wmode),            # unembed_w
            pl.BlockSpec((1, Kp), lambda i, j: (0, 0), **wmode),             # unembed_b
        ]
        out_specs = pl.BlockSpec((tile_n, Kp), lambda i, j: (i, 0))
        scratch = [pltpu.VMEM((tile_n, Dp), jnp.float32)]
        dims = ("parallel", "arbitrary")

    out = pl.pallas_call(
        kernel,
        out_shape=jax.ShapeDtypeStruct((N_pad, Kp), jnp.float32),
        grid=grid,
        in_specs=in_specs,
        out_specs=out_specs,
        scratch_shapes=scratch,
        compiler_params=pltpu.CompilerParams(
            dimension_semantics=dims,
            vmem_limit_bytes=vmem_limit,
        ),
        cost_estimate=cost,
    )(patches, ew, eb, w1, b1, w2, b2, uw, ub)

    # --- feature2img back-end: un-pad + PixelShuffle(8) back to NCHW ---------
    out = out[:N, :K]
    out = out.reshape(B, hh, ww, C, PATCH, PATCH)
    out = out.transpose(0, 3, 1, 4, 2, 5).reshape(B, C, H, W)
    return out.astype(x.dtype)


# ----------------------------------- main ----------------------------------- #

if __name__ == "__main__":
    img_size = 16
    in_channels = 4
    embedding_dim = 32
    batch = 2

    key = jax.random.PRNGKey(0)
    k_param, k_x = jax.random.split(key)
    params = init_decoder_params(k_param, in_channels, embedding_dim)
    x = jax.random.normal(k_x, (batch, in_channels, img_size, img_size),
                          dtype=jnp.float32)

    # Default path: fully fused, all weights resident (fits easily at D=32).
    fwd = jax.jit(decoder_forward)
    y = jax.block_until_ready(fwd(params, x))
    assert y.shape == (batch, in_channels, img_size, img_size)
    assert jnp.isfinite(y).all()

    # Also exercise the per-block weight-streaming path (used automatically for
    # large embedding_dim on 64 MiB-VMEM chips) and check it matches.
    fwd_stream = jax.jit(
        functools.partial(decoder_forward, stream_block_weights=True))
    y_s = jax.block_until_ready(fwd_stream(params, x))
    assert y_s.shape == y.shape
    assert jnp.allclose(y, y_s, rtol=1e-4, atol=1e-4)

    print("KERNEL_OK")
</pallas_src>

<mosaic_0001>
module attributes {stable_mosaic.version = 11 : i64} {
  func.func @_decoder_kernel_resident(%arg0: i32, %arg1: memref<16x256xbf16, #tpu.memory_space<vmem>>, %arg2: memref<256x128xbf16, #tpu.memory_space<vmem>>, %arg3: memref<1x128xf32, #tpu.memory_space<vmem>>, %arg4: memref<5x128x128xbf16, #tpu.memory_space<vmem>>, %arg5: memref<5x1x128xf32, #tpu.memory_space<vmem>>, %arg6: memref<5x128x128xbf16, #tpu.memory_space<vmem>>, %arg7: memref<5x1x128xf32, #tpu.memory_space<vmem>>, %arg8: memref<128x256xbf16, #tpu.memory_space<vmem>>, %arg9: memref<1x256xf32, #tpu.memory_space<vmem>>, %arg10: memref<16x256xf32, #tpu.memory_space<vmem>>) attributes {dimension_semantics = [#tpu.dimension_semantics<parallel>], iteration_bounds = array<i64: 1>, scalar_prefetch = 0 : i64, scratch_operands = 0 : i64, tpu.core_type = #tpu.core_type<tc>, window_params = [{transform_indices = @transform_0, window_bounds = array<i64: 16, 256>}, {pipeline_mode = #tpu.pipeline_mode<synchronous>, transform_indices = @transform_1, window_bounds = array<i64: 256, 128>}, {pipeline_mode = #tpu.pipeline_mode<synchronous>, transform_indices = @transform_2, window_bounds = array<i64: 1, 128>}, {pipeline_mode = #tpu.pipeline_mode<synchronous>, transform_indices = @transform_3, window_bounds = array<i64: 5, 128, 128>}, {pipeline_mode = #tpu.pipeline_mode<synchronous>, transform_indices = @transform_4, window_bounds = array<i64: 5, 1, 128>}, {pipeline_mode = #tpu.pipeline_mode<synchronous>, transform_indices = @transform_5, window_bounds = array<i64: 5, 128, 128>}, {pipeline_mode = #tpu.pipeline_mode<synchronous>, transform_indices = @transform_6, window_bounds = array<i64: 5, 1, 128>}, {pipeline_mode = #tpu.pipeline_mode<synchronous>, transform_indices = @transform_7, window_bounds = array<i64: 128, 256>}, {pipeline_mode = #tpu.pipeline_mode<synchronous>, transform_indices = @transform_8, window_bounds = array<i64: 1, 256>}, {transform_indices = @transform_9, window_bounds = array<i64: 16, 256>}]} {
    %c0 = arith.constant 0 : index
    %c0_0 = arith.constant 0 : index
    %0 = vector.load %arg1[%c0, %c0_0] : memref<16x256xbf16, #tpu.memory_space<vmem>>, vector<16x256xbf16>
    %c0_1 = arith.constant 0 : index
    %c0_2 = arith.constant 0 : index
    %1 = vector.load %arg2[%c0_1, %c0_2] : memref<256x128xbf16, #tpu.memory_space<vmem>>, vector<256x128xbf16>
    %cst = arith.constant dense<0.000000e+00> : vector<16x128xf32>
    %2 = tpu.matmul %0, %1, %cst {dimension_numbers = #tpu.dot_dimension_numbers<[1], [0], [0], [1], [0, 0, 1, 1], [], []>} : vector<16x256xbf16>, vector<256x128xbf16>, vector<16x128xf32> -> vector<16x128xf32>
    %c0_3 = arith.constant 0 : index
    %c0_4 = arith.constant 0 : index
    %3 = vector.load %arg3[%c0_3, %c0_4] : memref<1x128xf32, #tpu.memory_space<vmem>>, vector<1x128xf32>
    %4 = vector.broadcast %3 : vector<1x128xf32> to vector<16x128xf32>
    %5 = arith.addf %2, %4 : vector<16x128xf32>
    %6 = arith.truncf %5 : vector<16x128xf32> to vector<16x128xbf16>
    %c0_5 = arith.constant 0 : index
    %c0_6 = arith.constant 0 : index
    %c0_7 = arith.constant 0 : index
    %7 = vector.load %arg4[%c0_5, %c0_6, %c0_7] : memref<5x128x128xbf16, #tpu.memory_space<vmem>>, vector<1x128x128xbf16>
    %8 = vector.shape_cast %7 : vector<1x128x128xbf16> to vector<128x128xbf16>
    %cst_8 = arith.constant dense<0.000000e+00> : vector<16x128xf32>
    %9 = tpu.matmul %6, %8, %cst_8 {dimension_numbers = #tpu.dot_dimension_numbers<[1], [0], [0], [1], [0, 0, 1, 1], [], []>} : vector<16x128xbf16>, vector<128x128xbf16>, vector<16x128xf32> -> vector<16x128xf32>
    %c0_9 = arith.constant 0 : index
    %c0_10 = arith.constant 0 : index
    %c0_11 = arith.constant 0 : index
    %10 = vector.load %arg5[%c0_9, %c0_10, %c0_11] : memref<5x1x128xf32, #tpu.memory_space<vmem>>, vector<1x1x128xf32>
    %11 = vector.shape_cast %10 : vector<1x1x128xf32> to vector<1x128xf32>
    %12 = vector.broadcast %11 : vector<1x128xf32> to vector<16x128xf32>
    %13 = arith.addf %9, %12 : vector<16x128xf32>
    %14 = arith.mulf %13, %13 : vector<16x128xf32>
    %15 = arith.mulf %13, %14 : vector<16x128xf32>
    %cst_12 = arith.constant 4.471500e-02 : f32
    %16 = vector.broadcast %cst_12 : f32 to vector<16x128xf32>
    %17 = arith.mulf %16, %15 : vector<16x128xf32>
    %18 = arith.addf %13, %17 : vector<16x128xf32>
    %cst_13 = arith.constant 0.797884583 : f32
    %19 = vector.broadcast %cst_13 : f32 to vector<16x128xf32>
    %20 = arith.mulf %19, %18 : vector<16x128xf32>
    %21 = math.tanh %20 : vector<16x128xf32>
    %cst_14 = arith.constant 1.000000e+00 : f32
    %22 = vector.broadcast %cst_14 : f32 to vector<16x128xf32>
    %23 = arith.addf %22, %21 : vector<16x128xf32>
    %cst_15 = arith.constant 5.000000e-01 : f32
    %24 = vector.broadcast %cst_15 : f32 to vector<16x128xf32>
    %25 = arith.mulf %24, %23 : vector<16x128xf32>
    %26 = arith.mulf %13, %25 : vector<16x128xf32>
    %27 = arith.truncf %26 : vector<16x128xf32> to vector<16x128xbf16>
    %c0_16 = arith.constant 0 : index
    %c0_17 = arith.constant 0 : index
    %c0_18 = arith.constant 0 : index
    %28 = vector.load %arg6[%c0_16, %c0_17, %c0_18] : memref<5x128x128xbf16, #tpu.memory_space<vmem>>, vector<1x128x128xbf16>
    %29 = vector.shape_cast %28 : vector<1x128x128xbf16> to vector<128x128xbf16>
    %cst_19 = arith.constant dense<0.000000e+00> : vector<16x128xf32>
    %30 = tpu.matmul %27, %29, %cst_19 {dimension_numbers = #tpu.dot_dimension_numbers<[1], [0], [0], [1], [0, 0, 1, 1], [], []>} : vector<16x128xbf16>, vector<128x128xbf16>, vector<16x128xf32> -> vector<16x128xf32>
    %c0_20 = arith.constant 0 : index
    %c0_21 = arith.constant 0 : index
    %c0_22 = arith.constant 0 : index
    %31 = vector.load %arg7[%c0_20, %c0_21, %c0_22] : memref<5x1x128xf32, #tpu.memory_space<vmem>>, vector<1x1x128xf32>
    %32 = vector.shape_cast %31 : vector<1x1x128xf32> to vector<1x128xf32>
    %33 = vector.broadcast %32 : vector<1x128xf32> to vector<16x128xf32>
    %34 = arith.addf %30, %33 : vector<16x128xf32>
    %35 = arith.addf %5, %34 : vector<16x128xf32>
    %36 = arith.truncf %35 : vector<16x128xf32> to vector<16x128xbf16>
    %c1 = arith.constant 1 : index
    %c0_23 = arith.constant 0 : index
    %c0_24 = arith.constant 0 : index
    %37 = vector.load %arg4[%c1, %c0_23, %c0_24] : memref<5x128x128xbf16, #tpu.memory_space<vmem>>, vector<1x128x128xbf16>
    %38 = vector.shape_cast %37 : vector<1x128x128xbf16> to vector<128x128xbf16>
    %cst_25 = arith.constant dense<0.000000e+00> : vector<16x128xf32>
    %39 = tpu.matmul %36, %38, %cst_25 {dimension_numbers = #tpu.dot_dimension_numbers<[1], [0], [0], [1], [0, 0, 1, 1], [], []>} : vector<16x128xbf16>, vector<128x128xbf16>, vector<16x128xf32> -> vector<16x128xf32>
    %c1_26 = arith.constant 1 : index
    %c0_27 = arith.constant 0 : index
    %c0_28 = arith.constant 0 : index
    %40 = vector.load %arg5[%c1_26, %c0_27, %c0_28] : memref<5x1x128xf32, #tpu.memory_space<vmem>>, vector<1x1x128xf32>
    %41 = vector.shape_cast %40 : vector<1x1x128xf32> to vector<1x128xf32>
    %42 = vector.broadcast %41 : vector<1x128xf32> to vector<16x128xf32>
    %43 = arith.addf %39, %42 : vector<16x128xf32>
    %44 = arith.mulf %43, %43 : vector<16x128xf32>
    %45 = arith.mulf %43, %44 : vector<16x128xf32>
    %cst_29 = arith.constant 4.471500e-02 : f32
    %46 = vector.broadcast %cst_29 : f32 to vector<16x128xf32>
    %47 = arith.mulf %46, %45 : vector<16x128xf32>
    %48 = arith.addf %43, %47 : vector<16x128xf32>
    %cst_30 = arith.constant 0.797884583 : f32
    %49 = vector.broadcast %cst_30 : f32 to vector<16x128xf32>
    %50 = arith.mulf %49, %48 : vector<16x128xf32>
    %51 = math.tanh %50 : vector<16x128xf32>
    %cst_31 = arith.constant 1.000000e+00 : f32
    %52 = vector.broadcast %cst_31 : f32 to vector<16x128xf32>
    %53 = arith.addf %52, %51 : vector<16x128xf32>
    %cst_32 = arith.constant 5.000000e-01 : f32
    %54 = vector.broadcast %cst_32 : f32 to vector<16x128xf32>
    %55 = arith.mulf %54, %53 : vector<16x128xf32>
    %56 = arith.mulf %43, %55 : vector<16x128xf32>
    %57 = arith.truncf %56 : vector<16x128xf32> to vector<16x128xbf16>
    %c1_33 = arith.constant 1 : index
    %c0_34 = arith.constant 0 : index
    %c0_35 = arith.constant 0 : index
    %58 = vector.load %arg6[%c1_33, %c0_34, %c0_35] : memref<5x128x128xbf16, #tpu.memory_space<vmem>>, vector<1x128x128xbf16>
    %59 = vector.shape_cast %58 : vector<1x128x128xbf16> to vector<128x128xbf16>
    %cst_36 = arith.constant dense<0.000000e+00> : vector<16x128xf32>
    %60 = tpu.matmul %57, %59, %cst_36 {dimension_numbers = #tpu.dot_dimension_numbers<[1], [0], [0], [1], [0, 0, 1, 1], [], []>} : vector<16x128xbf16>, vector<128x128xbf16>, vector<16x128xf32> -> vector<16x128xf32>
    %c1_37 = arith.constant 1 : index
    %c0_38 = arith.constant 0 : index
    %c0_39 = arith.constant 0 : index
    %61 = vector.load %arg7[%c1_37, %c0_38, %c0_39] : memref<5x1x128xf32, #tpu.memory_space<vmem>>, vector<1x1x128xf32>
    %62 = vector.shape_cast %61 : vector<1x1x128xf32> to vector<1x128xf32>
    %63 = vector.broadcast %62 : vector<1x128xf32> to vector<16x128xf32>
    %64 = arith.addf %60, %63 : vector<16x128xf32>
    %65 = arith.addf %35, %64 : vector<16x128xf32>
    %66 = arith.truncf %65 : vector<16x128xf32> to vector<16x128xbf16>
    %c2 = arith.constant 2 : index
    %c0_40 = arith.constant 0 : index
    %c0_41 = arith.constant 0 : index
    %67 = vector.load %arg4[%c2, %c0_40, %c0_41] : memref<5x128x128xbf16, #tpu.memory_space<vmem>>, vector<1x128x128xbf16>
    %68 = vector.shape_cast %67 : vector<1x128x128xbf16> to vector<128x128xbf16>
    %cst_42 = arith.constant dense<0.000000e+00> : vector<16x128xf32>
    %69 = tpu.matmul %66, %68, %cst_42 {dimension_numbers = #tpu.dot_dimension_numbers<[1], [0], [0], [1], [0, 0, 1, 1], [], []>} : vector<16x128xbf16>, vector<128x128xbf16>, vector<16x128xf32> -> vector<16x128xf32>
    %c2_43 = arith.constant 2 : index
    %c0_44 = arith.constant 0 : index
    %c0_45 = arith.constant 0 : index
    %70 = vector.load %arg5[%c2_43, %c0_44, %c0_45] : memref<5x1x128xf32, #tpu.memory_space<vmem>>, vector<1x1x128xf32>
    %71 = vector.shape_cast %70 : vector<1x1x128xf32> to vector<1x128xf32>
    %72 = vector.broadcast %71 : vector<1x128xf32> to vector<16x128xf32>
    %73 = arith.addf %69, %72 : vector<16x128xf32>
    %74 = arith.mulf %73, %73 : vector<16x128xf32>
    %75 = arith.mulf %73, %74 : vector<16x128xf32>
    %cst_46 = arith.constant 4.471500e-02 : f32
    %76 = vector.broadcast %cst_46 : f32 to vector<16x128xf32>
    %77 = arith.mulf %76, %75 : vector<16x128xf32>
    %78 = arith.addf %73, %77 : vector<16x128xf32>
    %cst_47 = arith.constant 0.797884583 : f32
    %79 = vector.broadcast %cst_47 : f32 to vector<16x128xf32>
    %80 = arith.mulf %79, %78 : vector<16x128xf32>
    %81 = math.tanh %80 : vector<16x128xf32>
    %cst_48 = arith.constant 1.000000e+00 : f32
    %82 = vector.broadcast %cst_48 : f32 to vector<16x128xf32>
    %83 = arith.addf %82, %81 : vector<16x128xf32>
    %cst_49 = arith.constant 5.000000e-01 : f32
    %84 = vector.broadcast %cst_49 : f32 to vector<16x128xf32>
    %85 = arith.mulf %84, %83 : vector<16x128xf32>
    %86 = arith.mulf %73, %85 : vector<16x128xf32>
    %87 = arith.truncf %86 : vector<16x128xf32> to vector<16x128xbf16>
    %c2_50 = arith.constant 2 : index
    %c0_51 = arith.constant 0 : index
    %c0_52 = arith.constant 0 : index
    %88 = vector.load %arg6[%c2_50, %c0_51, %c0_52] : memref<5x128x128xbf16, #tpu.memory_space<vmem>>, vector<1x128x128xbf16>
    %89 = vector.shape_cast %88 : vector<1x128x128xbf16> to vector<128x128xbf16>
    %cst_53 = arith.constant dense<0.000000e+00> : vector<16x128xf32>
    %90 = tpu.matmul %87, %89, %cst_53 {dimension_numbers = #tpu.dot_dimension_numbers<[1], [0], [0], [1], [0, 0, 1, 1], [], []>} : vector<16x128xbf16>, vector<128x128xbf16>, vector<16x128xf32> -> vector<16x128xf32>
    %c2_54 = arith.constant 2 : index
    %c0_55 = arith.constant 0 : index
    %c0_56 = arith.constant 0 : index
    %91 = vector.load %arg7[%c2_54, %c0_55, %c0_56] : memref<5x1x128xf32, #tpu.memory_space<vmem>>, vector<1x1x128xf32>
    %92 = vector.shape_cast %91 : vector<1x1x128xf32> to vector<1x128xf32>
    %93 = vector.broadcast %92 : vector<1x128xf32> to vector<16x128xf32>
    %94 = arith.addf %90, %93 : vector<16x128xf32>
    %95 = arith.addf %65, %94 : vector<16x128xf32>
    %96 = arith.truncf %95 : vector<16x128xf32> to vector<16x128xbf16>
    %c3 = arith.constant 3 : index
    %c0_57 = arith.constant 0 : index
    %c0_58 = arith.constant 0 : index
    %97 = vector.load %arg4[%c3, %c0_57, %c0_58] : memref<5x128x128xbf16, #tpu.memory_space<vmem>>, vector<1x128x128xbf16>
    %98 = vector.shape_cast %97 : vector<1x128x128xbf16> to vector<128x128xbf16>
    %cst_59 = arith.constant dense<0.000000e+00> : vector<16x128xf32>
    %99 = tpu.matmul %96, %98, %cst_59 {dimension_numbers = #tpu.dot_dimension_numbers<[1], [0], [0], [1], [0, 0, 1, 1], [], []>} : vector<16x128xbf16>, vector<128x128xbf16>, vector<16x128xf32> -> vector<16x128xf32>
    %c3_60 = arith.constant 3 : index
    %c0_61 = arith.constant 0 : index
    %c0_62 = arith.constant 0 : index
    %100 = vector.load %arg5[%c3_60, %c0_61, %c0_62] : memref<5x1x128xf32, #tpu.memory_space<vmem>>, vector<1x1x128xf32>
    %101 = vector.shape_cast %100 : vector<1x1x128xf32> to vector<1x128xf32>
    %102 = vector.broadcast %101 : vector<1x128xf32> to vector<16x128xf32>
    %103 = arith.addf %99, %102 : vector<16x128xf32>
    %104 = arith.mulf %103, %103 : vector<16x128xf32>
    %105 = arith.mulf %103, %104 : vector<16x128xf32>
    %cst_63 = arith.constant 4.471500e-02 : f32
    %106 = vector.broadcast %cst_63 : f32 to vector<16x128xf32>
    %107 = arith.mulf %106, %105 : vector<16x128xf32>
    %108 = arith.addf %103, %107 : vector<16x128xf32>
    %cst_64 = arith.constant 0.797884583 : f32
    %109 = vector.broadcast %cst_64 : f32 to vector<16x128xf32>
    %110 = arith.mulf %109, %108 : vector<16x128xf32>
    %111 = math.tanh %110 : vector<16x128xf32>
    %cst_65 = arith.constant 1.000000e+00 : f32
    %112 = vector.broadcast %cst_65 : f32 to vector<16x128xf32>
    %113 = arith.addf %112, %111 : vector<16x128xf32>
    %cst_66 = arith.constant 5.000000e-01 : f32
    %114 = vector.broadcast %cst_66 : f32 to vector<16x128xf32>
    %115 = arith.mulf %114, %113 : vector<16x128xf32>
    %116 = arith.mulf %103, %115 : vector<16x128xf32>
    %117 = arith.truncf %116 : vector<16x128xf32> to vector<16x128xbf16>
    %c3_67 = arith.constant 3 : index
    %c0_68 = arith.constant 0 : index
    %c0_69 = arith.constant 0 : index
    %118 = vector.load %arg6[%c3_67, %c0_68, %c0_69] : memref<5x128x128xbf16, #tpu.memory_space<vmem>>, vector<1x128x128xbf16>
    %119 = vector.shape_cast %118 : vector<1x128x128xbf16> to vector<128x128xbf16>
    %cst_70 = arith.constant dense<0.000000e+00> : vector<16x128xf32>
    %120 = tpu.matmul %117, %119, %cst_70 {dimension_numbers = #tpu.dot_dimension_numbers<[1], [0], [0], [1], [0, 0, 1, 1], [], []>} : vector<16x128xbf16>, vector<128x128xbf16>, vector<16x128xf32> -> vector<16x128xf32>
    %c3_71 = arith.constant 3 : index
    %c0_72 = arith.constant 0 : index
    %c0_73 = arith.constant 0 : index
    %121 = vector.load %arg7[%c3_71, %c0_72, %c0_73] : memref<5x1x128xf32, #tpu.memory_space<vmem>>, vector<1x1x128xf32>
    %122 = vector.shape_cast %121 : vector<1x1x128xf32> to vector<1x128xf32>
    %123 = vector.broadcast %122 : vector<1x128xf32> to vector<16x128xf32>
    %124 = arith.addf %120, %123 : vector<16x128xf32>
    %125 = arith.addf %95, %124 : vector<16x128xf32>
    %126 = arith.truncf %125 : vector<16x128xf32> to vector<16x128xbf16>
    %c4 = arith.constant 4 : index
    %c0_74 = arith.constant 0 : index
    %c0_75 = arith.constant 0 : index
    %127 = vector.load %arg4[%c4, %c0_74, %c0_75] : memref<5x128x128xbf16, #tpu.memory_space<vmem>>, vector<1x128x128xbf16>
    %128 = vector.shape_cast %127 : vector<1x128x128xbf16> to vector<128x128xbf16>
    %cst_76 = arith.constant dense<0.000000e+00> : vector<16x128xf32>
    %129 = tpu.matmul %126, %128, %cst_76 {dimension_numbers = #tpu.dot_dimension_numbers<[1], [0], [0], [1], [0, 0, 1, 1], [], []>} : vector<16x128xbf16>, vector<128x128xbf16>, vector<16x128xf32> -> vector<16x128xf32>
    %c4_77 = arith.constant 4 : index
    %c0_78 = arith.constant 0 : index
    %c0_79 = arith.constant 0 : index
    %130 = vector.load %arg5[%c4_77, %c0_78, %c0_79] : memref<5x1x128xf32, #tpu.memory_space<vmem>>, vector<1x1x128xf32>
    %131 = vector.shape_cast %130 : vector<1x1x128xf32> to vector<1x128xf32>
    %132 = vector.broadcast %131 : vector<1x128xf32> to vector<16x128xf32>
    %133 = arith.addf %129, %132 : vector<16x128xf32>
    %134 = arith.mulf %133, %133 : vector<16x128xf32>
    %135 = arith.mulf %133, %134 : vector<16x128xf32>
    %cst_80 = arith.constant 4.471500e-02 : f32
    %136 = vector.broadcast %cst_80 : f32 to vector<16x128xf32>
    %137 = arith.mulf %136, %135 : vector<16x128xf32>
    %138 = arith.addf %133, %137 : vector<16x128xf32>
    %cst_81 = arith.constant 0.797884583 : f32
    %139 = vector.broadcast %cst_81 : f32 to vector<16x128xf32>
    %140 = arith.mulf %139, %138 : vector<16x128xf32>
    %141 = math.tanh %140 : vector<16x128xf32>
    %cst_82 = arith.constant 1.000000e+00 : f32
    %142 = vector.broadcast %cst_82 : f32 to vector<16x128xf32>
    %143 = arith.addf %142, %141 : vector<16x128xf32>
    %cst_83 = arith.constant 5.000000e-01 : f32
    %144 = vector.broadcast %cst_83 : f32 to vector<16x128xf32>
    %145 = arith.mulf %144, %143 : vector<16x128xf32>
    %146 = arith.mulf %133, %145 : vector<16x128xf32>
    %147 = arith.truncf %146 : vector<16x128xf32> to vector<16x128xbf16>
    %c4_84 = arith.constant 4 : index
    %c0_85 = arith.constant 0 : index
    %c0_86 = arith.constant 0 : index
    %148 = vector.load %arg6[%c4_84, %c0_85, %c0_86] : memref<5x128x128xbf16, #tpu.memory_space<vmem>>, vector<1x128x128xbf16>
    %149 = vector.shape_cast %148 : vector<1x128x128xbf16> to vector<128x128xbf16>
    %cst_87 = arith.constant dense<0.000000e+00> : vector<16x128xf32>
    %150 = tpu.matmul %147, %149, %cst_87 {dimension_numbers = #tpu.dot_dimension_numbers<[1], [0], [0], [1], [0, 0, 1, 1], [], []>} : vector<16x128xbf16>, vector<128x128xbf16>, vector<16x128xf32> -> vector<16x128xf32>
    %c4_88 = arith.constant 4 : index
    %c0_89 = arith.constant 0 : index
    %c0_90 = arith.constant 0 : index
    %151 = vector.load %arg7[%c4_88, %c0_89, %c0_90] : memref<5x1x128xf32, #tpu.memory_space<vmem>>, vector<1x1x128xf32>
    %152 = vector.shape_cast %151 : vector<1x1x128xf32> to vector<1x128xf32>
    %153 = vector.broadcast %152 : vector<1x128xf32> to vector<16x128xf32>
    %154 = arith.addf %150, %153 : vector<16x128xf32>
    %155 = arith.addf %125, %154 : vector<16x128xf32>
    %156 = arith.truncf %155 : vector<16x128xf32> to vector<16x128xbf16>
    %c0_91 = arith.constant 0 : index
    %c0_92 = arith.constant 0 : index
    %157 = vector.load %arg8[%c0_91, %c0_92] : memref<128x256xbf16, #tpu.memory_space<vmem>>, vector<128x256xbf16>
    %cst_93 = arith.constant dense<0.000000e+00> : vector<16x256xf32>
    %158 = tpu.matmul %156, %157, %cst_93 {dimension_numbers = #tpu.dot_dimension_numbers<[1], [0], [0], [1], [0, 0, 1, 1], [], []>} : vector<16x128xbf16>, vector<128x256xbf16>, vector<16x256xf32> -> vector<16x256xf32>
    %c0_94 = arith.constant 0 : index
    %c0_95 = arith.constant 0 : index
    %159 = vector.load %arg9[%c0_94, %c0_95] : memref<1x256xf32, #tpu.memory_space<vmem>>, vector<1x256xf32>
    %160 = vector.broadcast %159 : vector<1x256xf32> to vector<16x256xf32>
    %161 = arith.addf %158, %160 : vector<16x256xf32>
    %c0_96 = arith.constant 0 : index
    %c0_97 = arith.constant 0 : index
    %162 = vector.load %arg10[%c0_96, %c0_97] : memref<16x256xf32, #tpu.memory_space<vmem>>, vector<16x256xf32>
    tpu.vector_store %arg10[%c0_96, %c0_97], %161 {strides = array<i32>} : memref<16x256xf32, #tpu.memory_space<vmem>>, vector<16x256xf32>,
    return
  }
  func.func @transform_0(%arg0: i32) -> (i32, i32) {
    %c0_i32 = arith.constant 0 : i32
    %c0_i32_0 = arith.constant 0 : i32
    return %arg0, %c0_i32 : i32, i32
  }
  func.func @transform_1(%arg0: i32) -> (i32, i32) {
    %c0_i32 = arith.constant 0 : i32
    %c0_i32_0 = arith.constant 0 : i32
    %c0_i32_1 = arith.constant 0 : i32
    return %c0_i32, %c0_i32_0 : i32, i32
  }
  func.func @transform_2(%arg0: i32) -> (i32, i32) {
    %c0_i32 = arith.constant 0 : i32
    %c0_i32_0 = arith.constant 0 : i32
    %c0_i32_1 = arith.constant 0 : i32
    return %c0_i32, %c0_i32_0 : i32, i32
  }
  func.func @transform_3(%arg0: i32) -> (i32, i32, i32) {
    %c0_i32 = arith.constant 0 : i32
    %c0_i32_0 = arith.constant 0 : i32
    %c0_i32_1 = arith.constant 0 : i32
    %c0_i32_2 = arith.constant 0 : i32
    return %c0_i32, %c0_i32_0, %c0_i32_1 : i32, i32, i32
  }
  func.func @transform_4(%arg0: i32) -> (i32, i32, i32) {
    %c0_i32 = arith.constant 0 : i32
    %c0_i32_0 = arith.constant 0 : i32
    %c0_i32_1 = arith.constant 0 : i32
    %c0_i32_2 = arith.constant 0 : i32
    return %c0_i32, %c0_i32_0, %c0_i32_1 : i32, i32, i32
  }
  func.func @transform_5(%arg0: i32) -> (i32, i32, i32) {
    %c0_i32 = arith.constant 0 : i32
    %c0_i32_0 = arith.constant 0 : i32
    %c0_i32_1 = arith.constant 0 : i32
    %c0_i32_2 = arith.constant 0 : i32
    return %c0_i32, %c0_i32_0, %c0_i32_1 : i32, i32, i32
  }
  func.func @transform_6(%arg0: i32) -> (i32, i32, i32) {
    %c0_i32 = arith.constant 0 : i32
    %c0_i32_0 = arith.constant 0 : i32
    %c0_i32_1 = arith.constant 0 : i32
    %c0_i32_2 = arith.constant 0 : i32
    return %c0_i32, %c0_i32_0, %c0_i32_1 : i32, i32, i32
  }
  func.func @transform_7(%arg0: i32) -> (i32, i32) {
    %c0_i32 = arith.constant 0 : i32
    %c0_i32_0 = arith.constant 0 : i32
    %c0_i32_1 = arith.constant 0 : i32
    return %c0_i32, %c0_i32_0 : i32, i32
  }
  func.func @transform_8(%arg0: i32) -> (i32, i32) {
    %c0_i32 = arith.constant 0 : i32
    %c0_i32_0 = arith.constant 0 : i32
    %c0_i32_1 = arith.constant 0 : i32
    return %c0_i32, %c0_i32_0 : i32, i32
  }
  func.func @transform_9(%arg0: i32) -> (i32, i32) {
    %c0_i32 = arith.constant 0 : i32
    %c0_i32_0 = arith.constant 0 : i32
    return %arg0, %c0_i32 : i32, i32
  }
}

</mosaic_0001>

<llo_original>
// kernel: decoder_forward.1
$region0: #{decoder_forward.1}
  #allocation0 [shape = 'u32[]', space=smem, size = 0x4, offset = 0x4, fixed_abs, tag = 'smem constant byte address 0x4 - core index']
  #allocation1 [shape = 'u32[144,128]{1,0:T(1,128)}', space=vmem, size = 0x12000, scoped, tag = 'internal scratch']
  %s0 = inlined_call_operand.vmem [shape: bf16[16,256], index: 0, kind: input, shape index: {}]
  %s1 = inlined_call_operand.vmem [shape: bf16[256,128], index: 1, kind: input, shape index: {}]
  %s2 = inlined_call_operand.vmem [shape: f32[1,128], index: 2, kind: input, shape index: {}]
  %s3 = inlined_call_operand.vmem [shape: bf16[5,128,128], index: 3, kind: input, shape index: {}]
  %s4 = inlined_call_operand.vmem [shape: f32[5,1,128], index: 4, kind: input, shape index: {}]
  %s5 = inlined_call_operand.vmem [shape: bf16[5,128,128], index: 5, kind: input, shape index: {}]
  %s6 = inlined_call_operand.vmem [shape: f32[5,1,128], index: 6, kind: input, shape index: {}]
  %s7 = inlined_call_operand.vmem [shape: bf16[128,256], index: 7, kind: input, shape index: {}]
  %s8 = inlined_call_operand.vmem [shape: f32[1,256], index: 8, kind: input, shape index: {}]
  %s9 = inlined_call_operand.vmem [shape: f32[16,256], index: 9, kind: output, shape index: {}]
  %s10 = sld [smem:[#allocation0]]
  $region46: #{decoder_forward.1} parent=0
    _
  %s12 = ssub.s32 1, %s10
  %s13 = scalar_select 0, %s12, %s10
  // Predicated region
  $region2: #{decoder_forward.1} parent=0 // pred_check
    _
  $region3: #{decoder_forward.1} parent=0 // pred_check_branch
    %15 = sbr.rel (0) target = $region5
  $region4: #{decoder_forward.1} parent=0 // pred_region
    _
  $region5: #{decoder_forward.1} parent=0 // pred_fallthru
    _
  // Predicated region
  $region6: #{decoder_forward.1} parent=0 // pred_check
    _
  $region7: #{decoder_forward.1} parent=0 // pred_check_branch
    %17 = sbr.rel (0) target = $region9
  $region8: #{decoder_forward.1} parent=0 // pred_region
    _
  $region9: #{decoder_forward.1} parent=0 // pred_fallthru
    _
  // Predicated region
  $region10: #{decoder_forward.1} parent=0 // pred_check
    _
  $region11: #{decoder_forward.1} parent=0 // pred_check_branch
    %19 = sbr.rel (0) target = $region13
  $region12: #{decoder_forward.1} parent=0 // pred_region
    _
  $region13: #{decoder_forward.1} parent=0 // pred_fallthru
    _
  // Predicated region
  $region14: #{decoder_forward.1} parent=0 // pred_check
    _
  $region15: #{decoder_forward.1} parent=0 // pred_check_branch
    %21 = sbr.rel (0) target = $region17
  $region16: #{decoder_forward.1} parent=0 // pred_region
    _
  $region17: #{decoder_forward.1} parent=0 // pred_fallthru
    _
  // Predicated region
  $region18: #{decoder_forward.1} parent=0 // pred_check
    _
  $region19: #{decoder_forward.1} parent=0 // pred_check_branch
    %23 = sbr.rel (0) target = $region21
  $region20: #{decoder_forward.1} parent=0 // pred_region
    _
  $region21: #{decoder_forward.1} parent=0 // pred_fallthru
    _
  // Predicated region
  $region22: #{decoder_forward.1} parent=0 // pred_check
    _
  $region23: #{decoder_forward.1} parent=0 // pred_check_branch
    %25 = sbr.rel (0) target = $region25
  $region24: #{decoder_forward.1} parent=0 // pred_region
    _
  $region25: #{decoder_forward.1} parent=0 // pred_fallthru
    _
  // Predicated region
  $region26: #{decoder_forward.1} parent=0 // pred_check
    _
  $region27: #{decoder_forward.1} parent=0 // pred_check_branch
    %27 = sbr.rel (0) target = $region29
  $region28: #{decoder_forward.1} parent=0 // pred_region
    _
  $region29: #{decoder_forward.1} parent=0 // pred_fallthru
    _
  // Predicated region
  $region30: #{decoder_forward.1} parent=0 // pred_check
    _
  $region31: #{decoder_forward.1} parent=0 // pred_check_branch
    %29 = sbr.rel (0) target = $region33
  $region32: #{decoder_forward.1} parent=0 // pred_region
    _
  $region33: #{decoder_forward.1} parent=0 // pred_fallthru
    _
  // Predicated region
  $region34: #{decoder_forward.1} parent=0 // pred_check
    _
  $region35: #{decoder_forward.1} parent=0 // pred_check_branch
    %31 = sbr.rel (0) target = $region37
  $region36: #{decoder_forward.1} parent=0 // pred_region
    _
  $region37: #{decoder_forward.1} parent=0 // pred_fallthru
    _
  %v33 = vld [vmem:[%s0] sm:$0xff]
  %v34 = vld [vmem:[%s0 + $0x8] sm:$0xff]
  %v35 = vld [vmem:[%s1] sm:$0xf]
  %v36 = vld [vmem:[%s1 + $0x4] sm:$0xf]
  %v37 = vld [vmem:[%s1 + $0x8] sm:$0xf]
  %v38 = vld [vmem:[%s1 + $0xc] sm:$0xf]
  %v39 = vld [vmem:[%s1 + $0x10] sm:$0xf]
  %v40 = vld [vmem:[%s1 + $0x14] sm:$0xf]
  %v41 = vld [vmem:[%s1 + $0x18] sm:$0xf]
  %v42 = vld [vmem:[%s1 + $0x1c] sm:$0xf]
  %v43 = vld [vmem:[%s1 + $0x20] sm:$0xf]
  %v44 = vld [vmem:[%s1 + $0x24] sm:$0xf]
  %v45 = vld [vmem:[%s1 + $0x28] sm:$0xf]
  %v46 = vld [vmem:[%s1 + $0x2c] sm:$0xf]
  %v47 = vld [vmem:[%s1 + $0x30] sm:$0xf]
  %v48 = vld [vmem:[%s1 + $0x34] sm:$0xf]
  %v49 = vld [vmem:[%s1 + $0x38] sm:$0xf]
  %v50 = vld [vmem:[%s1 + $0x3c] sm:$0xf]
  %v51 = vld [vmem:[%s1 + $0x40] sm:$0xf]
  %v52 = vld [vmem:[%s1 + $0x44] sm:$0xf]
  %v53 = vld [vmem:[%s1 + $0x48] sm:$0xf]
  %v54 = vld [vmem:[%s1 + $0x4c] sm:$0xf]
  %v55 = vld [vmem:[%s1 + $0x50] sm:$0xf]
  %v56 = vld [vmem:[%s1 + $0x54] sm:$0xf]
  %v57 = vld [vmem:[%s1 + $0x58] sm:$0xf]
  %v58 = vld [vmem:[%s1 + $0x5c] sm:$0xf]
  %v59 = vld [vmem:[%s1 + $0x60] sm:$0xf]
  %v60 = vld [vmem:[%s1 + $0x64] sm:$0xf]
  %v61 = vld [vmem:[%s1 + $0x68] sm:$0xf]
  %v62 = vld [vmem:[%s1 + $0x6c] sm:$0xf]
  %v63 = vld [vmem:[%s1 + $0x70] sm:$0xf]
  %v64 = vld [vmem:[%s1 + $0x74] sm:$0xf]
  %v65 = vld [vmem:[%s1 + $0x78] sm:$0xf]
  %v66 = vld [vmem:[%s1 + $0x7c] sm:$0xf]
  %v67 = vld [vmem:[%s2] sm:$0x1]
  %v69 = vlaneseq
  %v70 = vshrl.u32 %v69, 7
  %v71 = vsub.s32 0, %v70
  %v72 = vrot.slane %v67, %v71
  %v76 = vunpack.c.l.b16 %v33
  %v77 = vunpack.c.h.b16 %v33
  %v78 = vunpack.c.l.b16 %v34
  %v79 = vunpack.c.h.b16 %v34
  %v80 = vpack.c.b16 %v78, %v76
  %v81 = vpack.c.b16 %v79, %v77
  %v116 = vunpack.c.l.b16 %v35
  %v117 = vunpack.c.l.b16 %v36
  %v118 = vunpack.c.l.b16 %v37
  %v119 = vunpack.c.l.b16 %v38
  %v120 = vunpack.c.l.b16 %v39
  %v121 = vunpack.c.l.b16 %v40
  %v122 = vunpack.c.l.b16 %v41
  %v123 = vunpack.c.l.b16 %v42
  %v124 = vunpack.c.l.b16 %v43
  %v125 = vunpack.c.l.b16 %v44
  %v126 = vunpack.c.l.b16 %v45
  %v127 = vunpack.c.l.b16 %v46
  %v128 = vunpack.c.l.b16 %v47
  %v129 = vunpack.c.l.b16 %v48
  %v130 = vunpack.c.l.b16 %v49
  %v131 = vunpack.c.l.b16 %v50
  %v132 = vunpack.c.l.b16 %v51
  %v133 = vunpack.c.l.b16 %v52
  %v134 = vunpack.c.l.b16 %v53
  %v135 = vunpack.c.l.b16 %v54
  %v136 = vunpack.c.l.b16 %v55
  %v137 = vunpack.c.l.b16 %v56
  %v138 = vunpack.c.l.b16 %v57
  %v139 = vunpack.c.l.b16 %v58
  %v140 = vunpack.c.l.b16 %v59
  %v141 = vunpack.c.l.b16 %v60
  %v142 = vunpack.c.l.b16 %v61
  %v143 = vunpack.c.l.b16 %v62
  %v144 = vunpack.c.l.b16 %v63
  %v145 = vunpack.c.l.b16 %v64
  %v146 = vunpack.c.l.b16 %v65
  %v147 = vunpack.c.l.b16 %v66
  %v148 = vpack.c.b16 %v117, %v116
  %v149 = vpack.c.b16 %v119, %v118
  %v150 = vpack.c.b16 %v121, %v120
  %v151 = vpack.c.b16 %v123, %v122
  %v152 = vpack.c.b16 %v125, %v124
  %v153 = vpack.c.b16 %v127, %v126
  %v154 = vpack.c.b16 %v129, %v128
  %v155 = vpack.c.b16 %v131, %v130
  %v156 = vpack.c.b16 %v133, %v132
  %v157 = vpack.c.b16 %v135, %v134
  %v158 = vpack.c.b16 %v137, %v136
  %v159 = vpack.c.b16 %v139, %v138
  %v160 = vpack.c.b16 %v141, %v140
  %v161 = vpack.c.b16 %v143, %v142
  %v162 = vpack.c.b16 %v145, %v144
  %v163 = vpack.c.b16 %v147, %v146
  %180 = vmatprep.subr.bf16.mxu0 0
  %181 = vmatpush1.bf16.msra.mxu0 %v155
  %182 = vmatprep.subr.bf16.mxu0 0
  %183 = vmatpush1.bf16.msra.mxu0 %v154
  %184 = vmatprep.subr.bf16.mxu0 0
  %185 = vmatpush1.bf16.msra.mxu0 %v153
  %186 = vmatprep.subr.bf16.mxu0 0
  %187 = vmatpush1.bf16.msra.mxu0 %v152
  %188 = vmatprep.subr.bf16.mxu0 0
  %189 = vmatpush1.bf16.msra.mxu0 %v151
  %190 = vmatprep.subr.bf16.mxu0 0
  %191 = vmatpush1.bf16.msra.mxu0 %v150
  %192 = vmatprep.subr.bf16.mxu0 0
  %193 = vmatpush1.bf16.msra.mxu0 %v149
  %194 = vmatprep.subr.bf16.mxu0 0
  %195 = vmatpush1.bf16.msra.mxu0 %v148
  %196 = vmatprep.subr.bf16.mxu0 0
  %197 = vmatpush2.bf16.msra.mxu0 %v163
  %198 = vmatprep.subr.bf16.mxu0 0
  %199 = vmatpush2.bf16.msra.mxu0 %v162
  %200 = vmatprep.subr.bf16.mxu0 0
  %201 = vmatpush2.bf16.msra.mxu0 %v161
  %202 = vmatprep.subr.bf16.mxu0 0
  %203 = vmatpush2.bf16.msra.mxu0 %v160
  %204 = vmatprep.subr.bf16.mxu0 0
  %205 = vmatpush2.bf16.msra.mxu0 %v159
  %206 = vmatprep.subr.bf16.mxu0 0
  %207 = vmatpush2.bf16.msra.mxu0 %v158
  %208 = vmatprep.subr.bf16.mxu0 0
  %209 = vmatpush2.bf16.msra.mxu0 %v157
  %210 = vmatprep.subr.bf16.mxu0 0
  %211 = vmatpush2.bf16.msra.mxu0 %v156
  %212 = vmatprep.mubr.bf16.mxu0 %v81
  %213 = vmatmul.mubr.bf16.gmra.mxu0 %v80
  %v214 = vpop.f32.mrf.mxu0
  %v215 = vadd.f32 %v72, %v214
  %v216 = vpop.f32.mrf.mxu0
  %v217 = vpop.f32.mrf.mxu0
  %v218 = vadd.f32 %v72, %v217
  %v219 = vpop.f32.mrf.mxu0
  %220 = vdwg.mxu0
  %v221 = vpack.c.bf16 %v218, %v215
  %v222 = vld [vmem:[%s3] sm:$0xf]
  %v223 = vld [vmem:[%s3 + $0x4] sm:$0xf]
  %v224 = vld [vmem:[%s3 + $0x8] sm:$0xf]
  %v225 = vld [vmem:[%s3 + $0xc] sm:$0xf]
  %v226 = vld [vmem:[%s3 + $0x10] sm:$0xf]
  %v227 = vld [vmem:[%s3 + $0x14] sm:$0xf]
  %v228 = vld [vmem:[%s3 + $0x18] sm:$0xf]
  %v229 = vld [vmem:[%s3 + $0x1c] sm:$0xf]
  %v230 = vld [vmem:[%s3 + $0x20] sm:$0xf]
  %v231 = vld [vmem:[%s3 + $0x24] sm:$0xf]
  %v232 = vld [vmem:[%s3 + $0x28] sm:$0xf]
  %v233 = vld [vmem:[%s3 + $0x2c] sm:$0xf]
  %v234 = vld [vmem:[%s3 + $0x30] sm:$0xf]
  %v235 = vld [vmem:[%s3 + $0x34] sm:$0xf]
  %v236 = vld [vmem:[%s3 + $0x38] sm:$0xf]
  %v237 = vld [vmem:[%s3 + $0x3c] sm:$0xf]
  %v238 = vld [vmem:[%s4] sm:$0x1]
  %v240 = vlaneseq
  %v241 = vshrl.u32 %v240, 7
  %v242 = vsub.s32 0, %v241
  %v243 = vrot.slane %v238, %v242
  %v261 = vunpack.c.l.b16 %v222
  %v262 = vunpack.c.l.b16 %v223
  %v263 = vunpack.c.l.b16 %v224
  %v264 = vunpack.c.l.b16 %v225
  %v265 = vunpack.c.l.b16 %v226
  %v266 = vunpack.c.l.b16 %v227
  %v267 = vunpack.c.l.b16 %v228
  %v268 = vunpack.c.l.b16 %v229
  %v269 = vunpack.c.l.b16 %v230
  %v270 = vunpack.c.l.b16 %v231
  %v271 = vunpack.c.l.b16 %v232
  %v272 = vunpack.c.l.b16 %v233
  %v273 = vunpack.c.l.b16 %v234
  %v274 = vunpack.c.l.b16 %v235
  %v275 = vunpack.c.l.b16 %v236
  %v276 = vunpack.c.l.b16 %v237
  %v277 = vpack.c.b16 %v262, %v261
  %v278 = vpack.c.b16 %v264, %v263
  %v279 = vpack.c.b16 %v266, %v265
  %v280 = vpack.c.b16 %v268, %v267
  %v281 = vpack.c.b16 %v270, %v269
  %v282 = vpack.c.b16 %v272, %v271
  %v283 = vpack.c.b16 %v274, %v273
  %v284 = vpack.c.b16 %v276, %v275
  %293 = vmatprep.subr.bf16.mxu0 0
  %294 = vmatpush1.bf16.msra.mxu0 %v284
  %295 = vmatprep.subr.bf16.mxu0 0
  %296 = vmatpush1.bf16.msra.mxu0 %v283
  %297 = vmatprep.subr.bf16.mxu0 0
  %298 = vmatpush1.bf16.msra.mxu0 %v282
  %299 = vmatprep.subr.bf16.mxu0 0
  %300 = vmatpush1.bf16.msra.mxu0 %v281
  %301 = vmatprep.subr.bf16.mxu0 0
  %302 = vmatpush1.bf16.msra.mxu0 %v280
  %303 = vmatprep.subr.bf16.mxu0 0
  %304 = vmatpush1.bf16.msra.mxu0 %v279
  %305 = vmatprep.subr.bf16.mxu0 0
  %306 = vmatpush1.bf16.msra.mxu0 %v278
  %307 = vmatprep.subr.bf16.mxu0 0
  %308 = vmatpush1.bf16.msra.mxu0 %v277
  %309 = vmatprep.subr.bf16.mxu0 0
  %310 = vmatpush2.bf16.msra.mxu0 0
  %311 = vmatprep.subr.bf16.mxu0 0
  %312 = vmatpush2.bf16.msra.mxu0 0
  %313 = vmatprep.subr.bf16.mxu0 0
  %314 = vmatpush2.bf16.msra.mxu0 0
  %315 = vmatprep.subr.bf16.mxu0 0
  %316 = vmatpush2.bf16.msra.mxu0 0
  %317 = vmatprep.subr.bf16.mxu0 0
  %318 = vmatpush2.bf16.msra.mxu0 0
  %319 = vmatprep.subr.bf16.mxu0 0
  %320 = vmatpush2.bf16.msra.mxu0 0
  %321 = vmatprep.subr.bf16.mxu0 0
  %322 = vmatpush2.bf16.msra.mxu0 0
  %323 = vmatprep.subr.bf16.mxu0 0
  %324 = vmatpush2.bf16.msra.mxu0 0
  %325 = vmatprep.mubr.bf16.mxu0 0
  %326 = vmatmul.mubr.bf16.gmra.mxu0 %v221
  %v327 = vpop.f32.mrf.mxu0
  %v328 = vadd.f32 %v243, %v327
  %v329 = vpop.f32.mrf.mxu0
  %v330 = vpop.f32.mrf.mxu0
  %v331 = vadd.f32 %v243, %v330
  %v332 = vpop.f32.mrf.mxu0
  %333 = vdwg.mxu0
  %v334 = vmul.f32 %v328, %v328
  %v335 = vmul.f32 %v331, %v331
  %v336 = vmul.f32 %v328, %v334
  %v337 = vmul.f32 %v331, %v335
  %v338 = vmul.f32 %v336, 0.044715
  %v339 = vmul.f32 %v337, 0.044715
  %v340 = vadd.f32 %v328, %v338
  %v341 = vadd.f32 %v331, %v339
  %v342 = vmul.f32 %v340, 0.7978846
  %v343 = vmul.f32 %v341, 0.7978846
  %v344 = vtanh.pop %v342
  %v345 = vtanh.pop %v343
  %v346 = vadd.f32 %v344, 1.0
  %v347 = vadd.f32 %v345, 1.0
  %v348 = vmul.f32 %v346, 0.5
  %v349 = vmul.f32 %v347, 0.5
  %v350 = vmul.f32 %v328, %v348
  %v351 = vmul.f32 %v331, %v349
  %v352 = vpack.c.bf16 %v351, %v350
  %v353 = vld [vmem:[%s5] sm:$0xf]
  %v354 = vld [vmem:[%s5 + $0x4] sm:$0xf]
  %v355 = vld [vmem:[%s5 + $0x8] sm:$0xf]
  %v356 = vld [vmem:[%s5 + $0xc] sm:$0xf]
  %v357 = vld [vmem:[%s5 + $0x10] sm:$0xf]
  %v358 = vld [vmem:[%s5 + $0x14] sm:$0xf]
  %v359 = vld [vmem:[%s5 + $0x18] sm:$0xf]
  %v360 = vld [vmem:[%s5 + $0x1c] sm:$0xf]
  %v361 = vld [vmem:[%s5 + $0x20] sm:$0xf]
  %v362 = vld [vmem:[%s5 + $0x24] sm:$0xf]
  %v363 = vld [vmem:[%s5 + $0x28] sm:$0xf]
  %v364 = vld [vmem:[%s5 + $0x2c] sm:$0xf]
  %v365 = vld [vmem:[%s5 + $0x30] sm:$0xf]
  %v366 = vld [vmem:[%s5 + $0x34] sm:$0xf]
  %v367 = vld [vmem:[%s5 + $0x38] sm:$0xf]
  %v368 = vld [vmem:[%s5 + $0x3c] sm:$0xf]
  %v369 = vld [vmem:[%s6] sm:$0x1]
  %v371 = vlaneseq
  %v372 = vshrl.u32 %v371, 7
  %v373 = vsub.s32 0, %v372
  %v374 = vrot.slane %v369, %v373
  %v392 = vunpack.c.l.b16 %v353
  %v393 = vunpack.c.l.b16 %v354
  %v394 = vunpack.c.l.b16 %v355
  %v395 = vunpack.c.l.b16 %v356
  %v396 = vunpack.c.l.b16 %v357
  %v397 = vunpack.c.l.b16 %v358
  %v398 = vunpack.c.l.b16 %v359
  %v399 = vunpack.c.l.b16 %v360
  %v400 = vunpack.c.l.b16 %v361
  %v401 = vunpack.c.l.b16 %v362
  %v402 = vunpack.c.l.b16 %v363
  %v403 = vunpack.c.l.b16 %v364
  %v404 = vunpack.c.l.b16 %v365
  %v405 = vunpack.c.l.b16 %v366
  %v406 = vunpack.c.l.b16 %v367
  %v407 = vunpack.c.l.b16 %v368
  %v408 = vpack.c.b16 %v393, %v392
  %v409 = vpack.c.b16 %v395, %v394
  %v410 = vpack.c.b16 %v397, %v396
  %v411 = vpack.c.b16 %v399, %v398
  %v412 = vpack.c.b16 %v401, %v400
  %v413 = vpack.c.b16 %v403, %v402
  %v414 = vpack.c.b16 %v405, %v404
  %v415 = vpack.c.b16 %v407, %v406
  %424 = vmatprep.subr.bf16.mxu0 0
  %425 = vmatpush1.bf16.msra.mxu0 %v415
  %426 = vmatprep.subr.bf16.mxu0 0
  %427 = vmatpush1.bf16.msra.mxu0 %v414
  %428 = vmatprep.subr.bf16.mxu0 0
  %429 = vmatpush1.bf16.msra.mxu0 %v413
  %430 = vmatprep.subr.bf16.mxu0 0
  %431 = vmatpush1.bf16.msra.mxu0 %v412
  %432 = vmatprep.subr.bf16.mxu0 0
  %433 = vmatpush1.bf16.msra.mxu0 %v411
  %434 = vmatprep.subr.bf16.mxu0 0
  %435 = vmatpush1.bf16.msra.mxu0 %v410
  %436 = vmatprep.subr.bf16.mxu0 0
  %437 = vmatpush1.bf16.msra.mxu0 %v409
  %438 = vmatprep.subr.bf16.mxu0 0
  %439 = vmatpush1.bf16.msra.mxu0 %v408
  %440 = vmatprep.subr.bf16.mxu0 0
  %441 = vmatpush2.bf16.msra.mxu0 0
  %442 = vmatprep.subr.bf16.mxu0 0
  %443 = vmatpush2.bf16.msra.mxu0 0
  %444 = vmatprep.subr.bf16.mxu0 0
  %445 = vmatpush2.bf16.msra.mxu0 0
  %446 = vmatprep.subr.bf16.mxu0 0
  %447 = vmatpush2.bf16.msra.mxu0 0
  %448 = vmatprep.subr.bf16.mxu0 0
  %449 = vmatpush2.bf16.msra.mxu0 0
  %450 = vmatprep.subr.bf16.mxu0 0
  %451 = vmatpush2.bf16.msra.mxu0 0
  %452 = vmatprep.subr.bf16.mxu0 0
  %453 = vmatpush2.bf16.msra.mxu0 0
  %454 = vmatprep.subr.bf16.mxu0 0
  %455 = vmatpush2.bf16.msra.mxu0 0
  %456 = vmatprep.mubr.bf16.mxu0 0
  %457 = vmatmul.mubr.bf16.gmra.mxu0 %v352
  %v458 = vpop.f32.mrf.mxu0
  %v459 = vadd.f32 %v374, %v458
  %v460 = vpop.f32.mrf.mxu0
  %v461 = vpop.f32.mrf.mxu0
  %v462 = vadd.f32 %v374, %v461
  %v463 = vpop.f32.mrf.mxu0
  %464 = vdwg.mxu0
  %v465 = vadd.f32 %v215, %v459
  %v466 = vadd.f32 %v218, %v462
  %v467 = vpack.c.bf16 %v466, %v465
  %s468 = scalar_lea.vmem %s3, 64
  %v469 = vld [vmem:[%s468] sm:$0xf]
  %v470 = vld [vmem:[%s468 + $0x4] sm:$0xf]
  %v471 = vld [vmem:[%s468 + $0x8] sm:$0xf]
  %v472 = vld [vmem:[%s468 + $0xc] sm:$0xf]
  %v473 = vld [vmem:[%s468 + $0x10] sm:$0xf]
  %v474 = vld [vmem:[%s468 + $0x14] sm:$0xf]
  %v475 = vld [vmem:[%s468 + $0x18] sm:$0xf]
  %v476 = vld [vmem:[%s468 + $0x1c] sm:$0xf]
  %v477 = vld [vmem:[%s468 + $0x20] sm:$0xf]
  %v478 = vld [vmem:[%s468 + $0x24] sm:$0xf]
  %v479 = vld [vmem:[%s468 + $0x28] sm:$0xf]
  %v480 = vld [vmem:[%s468 + $0x2c] sm:$0xf]
  %v481 = vld [vmem:[%s468 + $0x30] sm:$0xf]
  %v482 = vld [vmem:[%s468 + $0x34] sm:$0xf]
  %v483 = vld [vmem:[%s468 + $0x38] sm:$0xf]
  %v484 = vld [vmem:[%s468 + $0x3c] sm:$0xf]
  %s485 = scalar_lea.vmem %s4, 1
  %v486 = vld [vmem:[%s485] sm:$0x1]
  %v488 = vlaneseq
  %v489 = vshrl.u32 %v488, 7
  %v490 = vsub.s32 0, %v489
  %v491 = vrot.slane %v486, %v490
  %v509 = vunpack.c.l.b16 %v469
  %v510 = vunpack.c.l.b16 %v470
  %v511 = vunpack.c.l.b16 %v471
  %v512 = vunpack.c.l.b16 %v472
  %v513 = vunpack.c.l.b16 %v473
  %v514 = vunpack.c.l.b16 %v474
  %v515 = vunpack.c.l.b16 %v475
  %v516 = vunpack.c.l.b16 %v476
  %v517 = vunpack.c.l.b16 %v477
  %v518 = vunpack.c.l.b16 %v478
  %v519 = vunpack.c.l.b16 %v479
  %v520 = vunpack.c.l.b16 %v480
  %v521 = vunpack.c.l.b16 %v481
  %v522 = vunpack.c.l.b16 %v482
  %v523 = vunpack.c.l.b16 %v483
  %v524 = vunpack.c.l.b16 %v484
  %v525 = vpack.c.b16 %v510, %v509
  %v526 = vpack.c.b16 %v512, %v511
  %v527 = vpack.c.b16 %v514, %v513
  %v528 = vpack.c.b16 %v516, %v515
  %v529 = vpack.c.b16 %v518, %v517
  %v530 = vpack.c.b16 %v520, %v519
  %v531 = vpack.c.b16 %v522, %v521
  %v532 = vpack.c.b16 %v524, %v523
  %541 = vmatprep.subr.bf16.mxu0 0
  %542 = vmatpush1.bf16.msra.mxu0 %v532
  %543 = vmatprep.subr.bf16.mxu0 0
  %544 = vmatpush1.bf16.msra.mxu0 %v531
  %545 = vmatprep.subr.bf16.mxu0 0
  %546 = vmatpush1.bf16.msra.mxu0 %v530
  %547 = vmatprep.subr.bf16.mxu0 0
  %548 = vmatpush1.bf16.msra.mxu0 %v529
  %549 = vmatprep.subr.bf16.mxu0 0
  %550 = vmatpush1.bf16.msra.mxu0 %v528
  %551 = vmatprep.subr.bf16.mxu0 0
  %552 = vmatpush1.bf16.msra.mxu0 %v527
  %553 = vmatprep.subr.bf16.mxu0 0
  %554 = vmatpush1.bf16.msra.mxu0 %v526
  %555 = vmatprep.subr.bf16.mxu0 0
  %556 = vmatpush1.bf16.msra.mxu0 %v525
  %557 = vmatprep.subr.bf16.mxu0 0
  %558 = vmatpush2.bf16.msra.mxu0 0
  %559 = vmatprep.subr.bf16.mxu0 0
  %560 = vmatpush2.bf16.msra.mxu0 0
  %561 = vmatprep.subr.bf16.mxu0 0
  %562 = vmatpush2.bf16.msra.mxu0 0
  %563 = vmatprep.subr.bf16.mxu0 0
  %564 = vmatpush2.bf16.msra.mxu0 0
  %565 = vmatprep.subr.bf16.mxu0 0
  %566 = vmatpush2.bf16.msra.mxu0 0
  %567 = vmatprep.subr.bf16.mxu0 0
  %568 = vmatpush2.bf16.msra.mxu0 0
  %569 = vmatprep.subr.bf16.mxu0 0
  %570 = vmatpush2.bf16.msra.mxu0 0
  %571 = vmatprep.subr.bf16.mxu0 0
  %572 = vmatpush2.bf16.msra.mxu0 0
  %573 = vmatprep.mubr.bf16.mxu0 0
  %574 = vmatmul.mubr.bf16.gmra.mxu0 %v467
  %v575 = vpop.f32.mrf.mxu0
  %v576 = vadd.f32 %v491, %v575
  %v577 = vpop.f32.mrf.mxu0
  %v578 = vpop.f32.mrf.mxu0
  %v579 = vadd.f32 %v491, %v578
  %v580 = vpop.f32.mrf.mxu0
  %581 = vdwg.mxu0
  %v582 = vmul.f32 %v576, %v576
  %v583 = vmul.f32 %v579, %v579
  %v584 = vmul.f32 %v576, %v582
  %v585 = vmul.f32 %v579, %v583
  %v586 = vmul.f32 %v584, 0.044715
  %v587 = vmul.f32 %v585, 0.044715
  %v588 = vadd.f32 %v576, %v586
  %v589 = vadd.f32 %v579, %v587
  %v590 = vmul.f32 %v588, 0.7978846
  %v591 = vmul.f32 %v589, 0.7978846
  %v592 = vtanh.pop %v590
  %v593 = vtanh.pop %v591
  %v594 = vadd.f32 %v592, 1.0
  %v595 = vadd.f32 %v593, 1.0
  %v596 = vmul.f32 %v594, 0.5
  %v597 = vmul.f32 %v595, 0.5
  %v598 = vmul.f32 %v576, %v596
  %v599 = vmul.f32 %v579, %v597
  %v600 = vpack.c.bf16 %v599, %v598
  %s601 = scalar_lea.vmem %s5, 64
  %v602 = vld [vmem:[%s601] sm:$0xf]
  %v603 = vld [vmem:[%s601 + $0x4] sm:$0xf]
  %v604 = vld [vmem:[%s601 + $0x8] sm:$0xf]
  %v605 = vld [vmem:[%s601 + $0xc] sm:$0xf]
  %v606 = vld [vmem:[%s601 + $0x10] sm:$0xf]
  %v607 = vld [vmem:[%s601 + $0x14] sm:$0xf]
  %v608 = vld [vmem:[%s601 + $0x18] sm:$0xf]
  %v609 = vld [vmem:[%s601 + $0x1c] sm:$0xf]
  %v610 = vld [vmem:[%s601 + $0x20] sm:$0xf]
  %v611 = vld [vmem:[%s601 + $0x24] sm:$0xf]
  %v612 = vld [vmem:[%s601 + $0x28] sm:$0xf]
  %v613 = vld [vmem:[%s601 + $0x2c] sm:$0xf]
  %v614 = vld [vmem:[%s601 + $0x30] sm:$0xf]
  %v615 = vld [vmem:[%s601 + $0x34] sm:$0xf]
  %v616 = vld [vmem:[%s601 + $0x38] sm:$0xf]
  %v617 = vld [vmem:[%s601 + $0x3c] sm:$0xf]
  %s618 = scalar_lea.vmem %s6, 1
  %v619 = vld [vmem:[%s618] sm:$0x1]
  %v621 = vlaneseq
  %v622 = vshrl.u32 %v621, 7
  %v623 = vsub.s32 0, %v622
  %v624 = vrot.slane %v619, %v623
  %v642 = vunpack.c.l.b16 %v602
  %v643 = vunpack.c.l.b16 %v603
  %v644 = vunpack.c.l.b16 %v604
  %v645 = vunpack.c.l.b16 %v605
  %v646 = vunpack.c.l.b16 %v606
  %v647 = vunpack.c.l.b16 %v607
  %v648 = vunpack.c.l.b16 %v608
  %v649 = vunpack.c.l.b16 %v609
  %v650 = vunpack.c.l.b16 %v610
  %v651 = vunpack.c.l.b16 %v611
  %v652 = vunpack.c.l.b16 %v612
  %v653 = vunpack.c.l.b16 %v613
  %v654 = vunpack.c.l.b16 %v614
  %v655 = vunpack.c.l.b16 %v615
  %v656 = vunpack.c.l.b16 %v616
  %v657 = vunpack.c.l.b16 %v617
  %v658 = vpack.c.b16 %v643, %v642
  %v659 = vpack.c.b16 %v645, %v644
  %v660 = vpack.c.b16 %v647, %v646
  %v661 = vpack.c.b16 %v649, %v648
  %v662 = vpack.c.b16 %v651, %v650
  %v663 = vpack.c.b16 %v653, %v652
  %v664 = vpack.c.b16 %v655, %v654
  %v665 = vpack.c.b16 %v657, %v656
  %674 = vmatprep.subr.bf16.mxu0 0
  %675 = vmatpush1.bf16.msra.mxu0 %v665
  %676 = vmatprep.subr.bf16.mxu0 0
  %677 = vmatpush1.bf16.msra.mxu0 %v664
  %678 = vmatprep.subr.bf16.mxu0 0
  %679 = vmatpush1.bf16.msra.mxu0 %v663
  %680 = vmatprep.subr.bf16.mxu0 0
  %681 = vmatpush1.bf16.msra.mxu0 %v662
  %682 = vmatprep.subr.bf16.mxu0 0
  %683 = vmatpush1.bf16.msra.mxu0 %v661
  %684 = vmatprep.subr.bf16.mxu0 0
  %685 = vmatpush1.bf16.msra.mxu0 %v660
  %686 = vmatprep.subr.bf16.mxu0 0
  %687 = vmatpush1.bf16.msra.mxu0 %v659
  %688 = vmatprep.subr.bf16.mxu0 0
  %689 = vmatpush1.bf16.msra.mxu0 %v658
  %690 = vmatprep.subr.bf16.mxu0 0
  %691 = vmatpush2.bf16.msra.mxu0 0
  %692 = vmatprep.subr.bf16.mxu0 0
  %693 = vmatpush2.bf16.msra.mxu0 0
  %694 = vmatprep.subr.bf16.mxu0 0
  %695 = vmatpush2.bf16.msra.mxu0 0
  %696 = vmatprep.subr.bf16.mxu0 0
  %697 = vmatpush2.bf16.msra.mxu0 0
  %698 = vmatprep.subr.bf16.mxu0 0
  %699 = vmatpush2.bf16.msra.mxu0 0
  %700 = vmatprep.subr.bf16.mxu0 0
  %701 = vmatpush2.bf16.msra.mxu0 0
  %702 = vmatprep.subr.bf16.mxu0 0
  %703 = vmatpush2.bf16.msra.mxu0 0
  %704 = vmatprep.subr.bf16.mxu0 0
  %705 = vmatpush2.bf16.msra.mxu0 0
  %706 = vmatprep.mubr.bf16.mxu0 0
  %707 = vmatmul.mubr.bf16.gmra.mxu0 %v600
  %v708 = vpop.f32.mrf.mxu0
  %v709 = vadd.f32 %v624, %v708
  %v710 = vpop.f32.mrf.mxu0
  %v711 = vpop.f32.mrf.mxu0
  %v712 = vadd.f32 %v624, %v711
  %v713 = vpop.f32.mrf.mxu0
  %714 = vdwg.mxu0
  %v715 = vadd.f32 %v465, %v709
  %v716 = vadd.f32 %v466, %v712
  %v717 = vpack.c.bf16 %v716, %v715
  %s718 = scalar_lea.vmem %s3, 128
  %v719 = vld [vmem:[%s718] sm:$0xf]
  %v720 = vld [vmem:[%s718 + $0x4] sm:$0xf]
  %v721 = vld [vmem:[%s718 + $0x8] sm:$0xf]
  %v722 = vld [vmem:[%s718 + $0xc] sm:$0xf]
  %v723 = vld [vmem:[%s718 + $0x10] sm:$0xf]
  %v724 = vld [vmem:[%s718 + $0x14] sm:$0xf]
  %v725 = vld [vmem:[%s718 + $0x18] sm:$0xf]
  %v726 = vld [vmem:[%s718 + $0x1c] sm:$0xf]
  %v727 = vld [vmem:[%s718 + $0x20] sm:$0xf]
  %v728 = vld [vmem:[%s718 + $0x24] sm:$0xf]
  %v729 = vld [vmem:[%s718 + $0x28] sm:$0xf]
  %v730 = vld [vmem:[%s718 + $0x2c] sm:$0xf]
  %v731 = vld [vmem:[%s718 + $0x30] sm:$0xf]
  %v732 = vld [vmem:[%s718 + $0x34] sm:$0xf]
  %v733 = vld [vmem:[%s718 + $0x38] sm:$0xf]
  %v734 = vld [vmem:[%s718 + $0x3c] sm:$0xf]
  %s735 = scalar_lea.vmem %s4, 2
  %v736 = vld [vmem:[%s735] sm:$0x1]
  %v738 = vlaneseq
  %v739 = vshrl.u32 %v738, 7
  %v740 = vsub.s32 0, %v739
  %v741 = vrot.slane %v736, %v740
  %v759 = vunpack.c.l.b16 %v719
  %v760 = vunpack.c.l.b16 %v720
  %v761 = vunpack.c.l.b16 %v721
  %v762 = vunpack.c.l.b16 %v722
  %v763 = vunpack.c.l.b16 %v723
  %v764 = vunpack.c.l.b16 %v724
  %v765 = vunpack.c.l.b16 %v725
  %v766 = vunpack.c.l.b16 %v726
  %v767 = vunpack.c.l.b16 %v727
  %v768 = vunpack.c.l.b16 %v728
  %v769 = vunpack.c.l.b16 %v729
  %v770 = vunpack.c.l.b16 %v730
  %v771 = vunpack.c.l.b16 %v731
  %v772 = vunpack.c.l.b16 %v732
  %v773 = vunpack.c.l.b16 %v733
  %v774 = vunpack.c.l.b16 %v734
  %v775 = vpack.c.b16 %v760, %v759
  %v776 = vpack.c.b16 %v762, %v761
  %v777 = vpack.c.b16 %v764, %v763
  %v778 = vpack.c.b16 %v766, %v765
  %v779 = vpack.c.b16 %v768, %v767
  %v780 = vpack.c.b16 %v770, %v769
  %v781 = vpack.c.b16 %v772, %v771
  %v782 = vpack.c.b16 %v774, %v773
  %791 = vmatprep.subr.bf16.mxu0 0
  %792 = vmatpush1.bf16.msra.mxu0 %v782
  %793 = vmatprep.subr.bf16.mxu0 0
  %794 = vmatpush1.bf16.msra.mxu0 %v781
  %795 = vmatprep.subr.bf16.mxu0 0
  %796 = vmatpush1.bf16.msra.mxu0 %v780
  %797 = vmatprep.subr.bf16.mxu0 0
  %798 = vmatpush1.bf16.msra.mxu0 %v779
  %799 = vmatprep.subr.bf16.mxu0 0
  %800 = vmatpush1.bf16.msra.mxu0 %v778
  %801 = vmatprep.subr.bf16.mxu0 0
  %802 = vmatpush1.bf16.msra.mxu0 %v777
  %803 = vmatprep.subr.bf16.mxu0 0
  %804 = vmatpush1.bf16.msra.mxu0 %v776
  %805 = vmatprep.subr.bf16.mxu0 0
  %806 = vmatpush1.bf16.msra.mxu0 %v775
  %807 = vmatprep.subr.bf16.mxu0 0
  %808 = vmatpush2.bf16.msra.mxu0 0
  %809 = vmatprep.subr.bf16.mxu0 0
  %810 = vmatpush2.bf16.msra.mxu0 0
  %811 = vmatprep.subr.bf16.mxu0 0
  %812 = vmatpush2.bf16.msra.mxu0 0
  %813 = vmatprep.subr.bf16.mxu0 0
  %814 = vmatpush2.bf16.msra.mxu0 0
  %815 = vmatprep.subr.bf16.mxu0 0
  %816 = vmatpush2.bf16.msra.mxu0 0
  %817 = vmatprep.subr.bf16.mxu0 0
  %818 = vmatpush2.bf16.msra.mxu0 0
  %819 = vmatprep.subr.bf16.mxu0 0
  %820 = vmatpush2.bf16.msra.mxu0 0
  %821 = vmatprep.subr.bf16.mxu0 0
  %822 = vmatpush2.bf16.msra.mxu0 0
  %823 = vmatprep.mubr.bf16.mxu0 0
  %824 = vmatmul.mubr.bf16.gmra.mxu0 %v717
  %v825 = vpop.f32.mrf.mxu0
  %v826 = vadd.f32 %v741, %v825
  %v827 = vpop.f32.mrf.mxu0
  %v828 = vpop.f32.mrf.mxu0
  %v829 = vadd.f32 %v741, %v828
  %v830 = vpop.f32.mrf.mxu0
  %831 = vdwg.mxu0
  %v832 = vmul.f32 %v826, %v826
  %v833 = vmul.f32 %v829, %v829
  %v834 = vmul.f32 %v826, %v832
  %v835 = vmul.f32 %v829, %v833
  %v836 = vmul.f32 %v834, 0.044715
  %v837 = vmul.f32 %v835, 0.044715
  %v838 = vadd.f32 %v826, %v836
  %v839 = vadd.f32 %v829, %v837
  %v840 = vmul.f32 %v838, 0.7978846
  %v841 = vmul.f32 %v839, 0.7978846
  %v842 = vtanh.pop %v840
  %v843 = vtanh.pop %v841
  %v844 = vadd.f32 %v842, 1.0
  %v845 = vadd.f32 %v843, 1.0
  %v846 = vmul.f32 %v844, 0.5
  %v847 = vmul.f32 %v845, 0.5
  %v848 = vmul.f32 %v826, %v846
  %v849 = vmul.f32 %v829, %v847
  %v850 = vpack.c.bf16 %v849, %v848
  %s851 = scalar_lea.vmem %s5, 128
  %v852 = vld [vmem:[%s851] sm:$0xf]
  %v853 = vld [vmem:[%s851 + $0x4] sm:$0xf]
  %v854 = vld [vmem:[%s851 + $0x8] sm:$0xf]
  %v855 = vld [vmem:[%s851 + $0xc] sm:$0xf]
  %v856 = vld [vmem:[%s851 + $0x10] sm:$0xf]
  %v857 = vld [vmem:[%s851 + $0x14] sm:$0xf]
  %v858 = vld [vmem:[%s851 + $0x18] sm:$0xf]
  %v859 = vld [vmem:[%s851 + $0x1c] sm:$0xf]
  %v860 = vld [vmem:[%s851 + $0x20] sm:$0xf]
  %v861 = vld [vmem:[%s851 + $0x24] sm:$0xf]
  %v862 = vld [vmem:[%s851 + $0x28] sm:$0xf]
  %v863 = vld [vmem:[%s851 + $0x2c] sm:$0xf]
  %v864 = vld [vmem:[%s851 + $0x30] sm:$0xf]
  %v865 = vld [vmem:[%s851 + $0x34] sm:$0xf]
  %v866 = vld [vmem:[%s851 + $0x38] sm:$0xf]
  %v867 = vld [vmem:[%s851 + $0x3c] sm:$0xf]
  %s868 = scalar_lea.vmem %s6, 2
  %v869 = vld [vmem:[%s868] sm:$0x1]
  %v871 = vlaneseq
  %v872 = vshrl.u32 %v871, 7
  %v873 = vsub.s32 0, %v872
  %v874 = vrot.slane %v869, %v873
  %v892 = vunpack.c.l.b16 %v852
  %v893 = vunpack.c.l.b16 %v853
  %v894 = vunpack.c.l.b16 %v854
  %v895 = vunpack.c.l.b16 %v855
  %v896 = vunpack.c.l.b16 %v856
  %v897 = vunpack.c.l.b16 %v857
  %v898 = vunpack.c.l.b16 %v858
  %v899 = vunpack.c.l.b16 %v859
  %v900 = vunpack.c.l.b16 %v860
  %v901 = vunpack.c.l.b16 %v861
  %v902 = vunpack.c.l.b16 %v862
  %v903 = vunpack.c.l.b16 %v863
  %v904 = vunpack.c.l.b16 %v864
  %v905 = vunpack.c.l.b16 %v865
  %v906 = vunpack.c.l.b16 %v866
  %v907 = vunpack.c.l.b16 %v867
  %v908 = vpack.c.b16 %v893, %v892
  %v909 = vpack.c.b16 %v895, %v894
  %v910 = vpack.c.b16 %v897, %v896
  %v911 = vpack.c.b16 %v899, %v898
  %v912 = vpack.c.b16 %v901, %v900
  %v913 = vpack.c.b16 %v903, %v902
  %v914 = vpack.c.b16 %v905, %v904
  %v915 = vpack.c.b16 %v907, %v906
  %924 = vmatprep.subr.bf16.mxu0 0
  %925 = vmatpush1.bf16.msra.mxu0 %v915
  %926 = vmatprep.subr.bf16.mxu0 0
  %927 = vmatpush1.bf16.msra.mxu0 %v914
  %928 = vmatprep.subr.bf16.mxu0 0
  %929 = vmatpush1.bf16.msra.mxu0 %v913
  %930 = vmatprep.subr.bf16.mxu0 0
  %931 = vmatpush1.bf16.msra.mxu0 %v912
  %932 = vmatprep.subr.bf16.mxu0 0
  %933 = vmatpush1.bf16.msra.mxu0 %v911
  %934 = vmatprep.subr.bf16.mxu0 0
  %935 = vmatpush1.bf16.msra.mxu0 %v910
  %936 = vmatprep.subr.bf16.mxu0 0
  %937 = vmatpush1.bf16.msra.mxu0 %v909
  %938 = vmatprep.subr.bf16.mxu0 0
  %939 = vmatpush1.bf16.msra.mxu0 %v908
  %940 = vmatprep.subr.bf16.mxu0 0
  %941 = vmatpush2.bf16.msra.mxu0 0
  %942 = vmatprep.subr.bf16.mxu0 0
  %943 = vmatpush2.bf16.msra.mxu0 0
  %944 = vmatprep.subr.bf16.mxu0 0
  %945 = vmatpush2.bf16.msra.mxu0 0
  %946 = vmatprep.subr.bf16.mxu0 0
  %947 = vmatpush2.bf16.msra.mxu0 0
  %948 = vmatprep.subr.bf16.mxu0 0
  %949 = vmatpush2.bf16.msra.mxu0 0
  %950 = vmatprep.subr.bf16.mxu0 0
  %951 = vmatpush2.bf16.msra.mxu0 0
  %952 = vmatprep.subr.bf16.mxu0 0
  %953 = vmatpush2.bf16.msra.mxu0 0
  %954 = vmatprep.subr.bf16.mxu0 0
  %955 = vmatpush2.bf16.msra.mxu0 0
  %956 = vmatprep.mubr.bf16.mxu0 0
  %957 = vmatmul.mubr.bf16.gmra.mxu0 %v850
  %v958 = vpop.f32.mrf.mxu0
  %v959 = vadd.f32 %v874, %v958
  %v960 = vpop.f32.mrf.mxu0
  %v961 = vpop.f32.mrf.mxu0
  %v962 = vadd.f32 %v874, %v961
  %v963 = vpop.f32.mrf.mxu0
  %964 = vdwg.mxu0
  %v965 = vadd.f32 %v715, %v959
  %v966 = vadd.f32 %v716, %v962
  %v967 = vpack.c.bf16 %v966, %v965
  %s968 = scalar_lea.vmem %s3, 192
  %v969 = vld [vmem:[%s968] sm:$0xf]
  %v970 = vld [vmem:[%s968 + $0x4] sm:$0xf]
  %v971 = vld [vmem:[%s968 + $0x8] sm:$0xf]
  %v972 = vld [vmem:[%s968 + $0xc] sm:$0xf]
  %v973 = vld [vmem:[%s968 + $0x10] sm:$0xf]
  %v974 = vld [vmem:[%s968 + $0x14] sm:$0xf]
  %v975 = vld [vmem:[%s968 + $0x18] sm:$0xf]
  %v976 = vld [vmem:[%s968 + $0x1c] sm:$0xf]
  %v977 = vld [vmem:[%s968 + $0x20] sm:$0xf]
  %v978 = vld [vmem:[%s968 + $0x24] sm:$0xf]
  %v979 = vld [vmem:[%s968 + $0x28] sm:$0xf]
  %v980 = vld [vmem:[%s968 + $0x2c] sm:$0xf]
  %v981 = vld [vmem:[%s968 + $0x30] sm:$0xf]
  %v982 = vld [vmem:[%s968 + $0x34] sm:$0xf]
  %v983 = vld [vmem:[%s968 + $0x38] sm:$0xf]
  %v984 = vld [vmem:[%s968 + $0x3c] sm:$0xf]
  %s985 = scalar_lea.vmem %s4, 3
  %v986 = vld [vmem:[%s985] sm:$0x1]
  %v988 = vlaneseq
  %v989 = vshrl.u32 %v988, 7
  %v990 = vsub.s32 0, %v989
  %v991 = vrot.slane %v986, %v990
  %v1009 = vunpack.c.l.b16 %v969
  %v1010 = vunpack.c.l.b16 %v970
  %v1011 = vunpack.c.l.b16 %v971
  %v1012 = vunpack.c.l.b16 %v972
  %v1013 = vunpack.c.l.b16 %v973
  %v1014 = vunpack.c.l.b16 %v974
  %v1015 = vunpack.c.l.b16 %v975
  %v1016 = vunpack.c.l.b16 %v976
  %v1017 = vunpack.c.l.b16 %v977
  %v1018 = vunpack.c.l.b16 %v978
  %v1019 = vunpack.c.l.b16 %v979
  %v1020 = vunpack.c.l.b16 %v980
  %v1021 = vunpack.c.l.b16 %v981
  %v1022 = vunpack.c.l.b16 %v982
  %v1023 = vunpack.c.l.b16 %v983
  %v1024 = vunpack.c.l.b16 %v984
  %v1025 = vpack.c.b16 %v1010, %v1009
  %v1026 = vpack.c.b16 %v1012, %v1011
  %v1027 = vpack.c.b16 %v1014, %v1013
  %v1028 = vpack.c.b16 %v1016, %v1015
  %v1029 = vpack.c.b16 %v1018, %v1017
  %v1030 = vpack.c.b16 %v1020, %v1019
  %v1031 = vpack.c.b16 %v1022, %v1021
  %v1032 = vpack.c.b16 %v1024, %v1023
  %1041 = vmatprep.subr.bf16.mxu0 0
  %1042 = vmatpush1.bf16.msra.mxu0 %v1032
  %1043 = vmatprep.subr.bf16.mxu0 0
  %1044 = vmatpush1.bf16.msra.mxu0 %v1031
  %1045 = vmatprep.subr.bf16.mxu0 0
  %1046 = vmatpush1.bf16.msra.mxu0 %v1030
  %1047 = vmatprep.subr.bf16.mxu0 0
  %1048 = vmatpush1.bf16.msra.mxu0 %v1029
  %1049 = vmatprep.subr.bf16.mxu0 0
  %1050 = vmatpush1.bf16.msra.mxu0 %v1028
  %1051 = vmatprep.subr.bf16.mxu0 0
  %1052 = vmatpush1.bf16.msra.mxu0 %v1027
  %1053 = vmatprep.subr.bf16.mxu0 0
  %1054 = vmatpush1.bf16.msra.mxu0 %v1026
  %1055 = vmatprep.subr.bf16.mxu0 0
  %1056 = vmatpush1.bf16.msra.mxu0 %v1025
  %1057 = vmatprep.subr.bf16.mxu0 0
  %1058 = vmatpush2.bf16.msra.mxu0 0
  %1059 = vmatprep.subr.bf16.mxu0 0
  %1060 = vmatpush2.bf16.msra.mxu0 0
  %1061 = vmatprep.subr.bf16.mxu0 0
  %1062 = vmatpush2.bf16.msra.mxu0 0
  %1063 = vmatprep.subr.bf16.mxu0 0
  %1064 = vmatpush2.bf16.msra.mxu0 0
  %1065 = vmatprep.subr.bf16.mxu0 0
  %1066 = vmatpush2.bf16.msra.mxu0 0
  %1067 = vmatprep.subr.bf16.mxu0 0
  %1068 = vmatpush2.bf16.msra.mxu0 0
  %1069 = vmatprep.subr.bf16.mxu0 0
  %1070 = vmatpush2.bf16.msra.mxu0 0
  %1071 = vmatprep.subr.bf16.mxu0 0
  %1072 = vmatpush2.bf16.msra.mxu0 0
  %1073 = vmatprep.mubr.bf16.mxu0 0
  %1074 = vmatmul.mubr.bf16.gmra.mxu0 %v967
  %v1075 = vpop.f32.mrf.mxu0
  %v1076 = vadd.f32 %v991, %v1075
  %v1077 = vpop.f32.mrf.mxu0
  %v1078 = vpop.f32.mrf.mxu0
  %v1079 = vadd.f32 %v991, %v1078
  %v1080 = vpop.f32.mrf.mxu0
  %1081 = vdwg.mxu0
  %v1082 = vmul.f32 %v1076, %v1076
  %v1083 = vmul.f32 %v1079, %v1079
  %v1084 = vmul.f32 %v1076, %v1082
  %v1085 = vmul.f32 %v1079, %v1083
  %v1086 = vmul.f32 %v1084, 0.044715
  %v1087 = vmul.f32 %v1085, 0.044715
  %v1088 = vadd.f32 %v1076, %v1086
  %v1089 = vadd.f32 %v1079, %v1087
  %v1090 = vmul.f32 %v1088, 0.7978846
  %v1091 = vmul.f32 %v1089, 0.7978846
  %v1092 = vtanh.pop %v1090
  %v1093 = vtanh.pop %v1091
  %v1094 = vadd.f32 %v1092, 1.0
  %v1095 = vadd.f32 %v1093, 1.0
  %v1096 = vmul.f32 %v1094, 0.5
  %v1097 = vmul.f32 %v1095, 0.5
  %v1098 = vmul.f32 %v1076, %v1096
  %v1099 = vmul.f32 %v1079, %v1097
  %v1100 = vpack.c.bf16 %v1099, %v1098
  %s1101 = scalar_lea.vmem %s5, 192
  %v1102 = vld [vmem:[%s1101] sm:$0xf]
  %v1103 = vld [vmem:[%s1101 + $0x4] sm:$0xf]
  %v1104 = vld [vmem:[%s1101 + $0x8] sm:$0xf]
  %v1105 = vld [vmem:[%s1101 + $0xc] sm:$0xf]
  %v1106 = vld [vmem:[%s1101 + $0x10] sm:$0xf]
  %v1107 = vld [vmem:[%s1101 + $0x14] sm:$0xf]
  %v1108 = vld [vmem:[%s1101 + $0x18] sm:$0xf]
  %v1109 = vld [vmem:[%s1101 + $0x1c] sm:$0xf]
  %v1110 = vld [vmem:[%s1101 + $0x20] sm:$0xf]
  %v1111 = vld [vmem:[%s1101 + $0x24] sm:$0xf]
  %v1112 = vld [vmem:[%s1101 + $0x28] sm:$0xf]
  %v1113 = vld [vmem:[%s1101 + $0x2c] sm:$0xf]
  %v1114 = vld [vmem:[%s1101 + $0x30] sm:$0xf]
  %v1115 = vld [vmem:[%s1101 + $0x34] sm:$0xf]
  %v1116 = vld [vmem:[%s1101 + $0x38] sm:$0xf]
  %v1117 = vld [vmem:[%s1101 + $0x3c] sm:$0xf]
  %s1118 = scalar_lea.vmem %s6, 3
  %v1119 = vld [vmem:[%s1118] sm:$0x1]
  %v1121 = vlaneseq
  %v1122 = vshrl.u32 %v1121, 7
  %v1123 = vsub.s32 0, %v1122
  %v1124 = vrot.slane %v1119, %v1123
  %v1142 = vunpack.c.l.b16 %v1102
  %v1143 = vunpack.c.l.b16 %v1103
  %v1144 = vunpack.c.l.b16 %v1104
  %v1145 = vunpack.c.l.b16 %v1105
  %v1146 = vunpack.c.l.b16 %v1106
  %v1147 = vunpack.c.l.b16 %v1107
  %v1148 = vunpack.c.l.b16 %v1108
  %v1149 = vunpack.c.l.b16 %v1109
  %v1150 = vunpack.c.l.b16 %v1110
  %v1151 = vunpack.c.l.b16 %v1111
  %v1152 = vunpack.c.l.b16 %v1112
  %v1153 = vunpack.c.l.b16 %v1113
  %v1154 = vunpack.c.l.b16 %v1114
  %v1155 = vunpack.c.l.b16 %v1115
  %v1156 = vunpack.c.l.b16 %v1116
  %v1157 = vunpack.c.l.b16 %v1117
  %v1158 = vpack.c.b16 %v1143, %v1142
  %v1159 = vpack.c.b16 %v1145, %v1144
  %v1160 = vpack.c.b16 %v1147, %v1146
  %v1161 = vpack.c.b16 %v1149, %v1148
  %v1162 = vpack.c.b16 %v1151, %v1150
  %v1163 = vpack.c.b16 %v1153, %v1152
  %v1164 = vpack.c.b16 %v1155, %v1154
  %v1165 = vpack.c.b16 %v1157, %v1156
  %1174 = vmatprep.subr.bf16.mxu0 0
  %1175 = vmatpush1.bf16.msra.mxu0 %v1165
  %1176 = vmatprep.subr.bf16.mxu0 0
  %1177 = vmatpush1.bf16.msra.mxu0 %v1164
  %1178 = vmatprep.subr.bf16.mxu0 0
  %1179 = vmatpush1.bf16.msra.mxu0 %v1163
  %1180 = vmatprep.subr.bf16.mxu0 0
  %1181 = vmatpush1.bf16.msra.mxu0 %v1162
  %1182 = vmatprep.subr.bf16.mxu0 0
  %1183 = vmatpush1.bf16.msra.mxu0 %v1161
  %1184 = vmatprep.subr.bf16.mxu0 0
  %1185 = vmatpush1.bf16.msra.mxu0 %v1160
  %1186 = vmatprep.subr.bf16.mxu0 0
  %1187 = vmatpush1.bf16.msra.mxu0 %v1159
  %1188 = vmatprep.subr.bf16.mxu0 0
  %1189 = vmatpush1.bf16.msra.mxu0 %v1158
  %1190 = vmatprep.subr.bf16.mxu0 0
  %1191 = vmatpush2.bf16.msra.mxu0 0
  %1192 = vmatprep.subr.bf16.mxu0 0
  %1193 = vmatpush2.bf16.msra.mxu0 0
  %1194 = vmatprep.subr.bf16.mxu0 0
  %1195 = vmatpush2.bf16.msra.mxu0 0
  %1196 = vmatprep.subr.bf16.mxu0 0
  %1197 = vmatpush2.bf16.msra.mxu0 0
  %1198 = vmatprep.subr.bf16.mxu0 0
  %1199 = vmatpush2.bf16.msra.mxu0 0
  %1200 = vmatprep.subr.bf16.mxu0 0
  %1201 = vmatpush2.bf16.msra.mxu0 0
  %1202 = vmatprep.subr.bf16.mxu0 0
  %1203 = vmatpush2.bf16.msra.mxu0 0
  %1204 = vmatprep.subr.bf16.mxu0 0
  %1205 = vmatpush2.bf16.msra.mxu0 0
  %1206 = vmatprep.mubr.bf16.mxu0 0
  %1207 = vmatmul.mubr.bf16.gmra.mxu0 %v1100
  %v1208 = vpop.f32.mrf.mxu0
  %v1209 = vadd.f32 %v1124, %v1208
  %v1210 = vpop.f32.mrf.mxu0
  %v1211 = vpop.f32.mrf.mxu0
  %v1212 = vadd.f32 %v1124, %v1211
  %v1213 = vpop.f32.mrf.mxu0
  %1214 = vdwg.mxu0
  %v1215 = vadd.f32 %v965, %v1209
  %v1216 = vadd.f32 %v966, %v1212
  %v1217 = vpack.c.bf16 %v1216, %v1215
  %s1218 = scalar_lea.vmem %s3, 256
  %v1219 = vld [vmem:[%s1218] sm:$0xf]
  %v1220 = vld [vmem:[%s1218 + $0x4] sm:$0xf]
  %v1221 = vld [vmem:[%s1218 + $0x8] sm:$0xf]
  %v1222 = vld [vmem:[%s1218 + $0xc] sm:$0xf]
  %v1223 = vld [vmem:[%s1218 + $0x10] sm:$0xf]
  %v1224 = vld [vmem:[%s1218 + $0x14] sm:$0xf]
  %v1225 = vld [vmem:[%s1218 + $0x18] sm:$0xf]
  %v1226 = vld [vmem:[%s1218 + $0x1c] sm:$0xf]
  %v1227 = vld [vmem:[%s1218 + $0x20] sm:$0xf]
  %v1228 = vld [vmem:[%s1218 + $0x24] sm:$0xf]
  %v1229 = vld [vmem:[%s1218 + $0x28] sm:$0xf]
  %v1230 = vld [vmem:[%s1218 + $0x2c] sm:$0xf]
  %v1231 = vld [vmem:[%s1218 + $0x30] sm:$0xf]
  %v1232 = vld [vmem:[%s1218 + $0x34] sm:$0xf]
  %v1233 = vld [vmem:[%s1218 + $0x38] sm:$0xf]
  %v1234 = vld [vmem:[%s1218 + $0x3c] sm:$0xf]
  %s1235 = scalar_lea.vmem %s4, 4
  %v1236 = vld [vmem:[%s1235] sm:$0x1]
  %v1238 = vlaneseq
  %v1239 = vshrl.u32 %v1238, 7
  %v1240 = vsub.s32 0, %v1239
  %v1241 = vrot.slane %v1236, %v1240
  %v1259 = vunpack.c.l.b16 %v1219
  %v1260 = vunpack.c.l.b16 %v1220
  %v1261 = vunpack.c.l.b16 %v1221
  %v1262 = vunpack.c.l.b16 %v1222
  %v1263 = vunpack.c.l.b16 %v1223
  %v1264 = vunpack.c.l.b16 %v1224
  %v1265 = vunpack.c.l.b16 %v1225
  %v1266 = vunpack.c.l.b16 %v1226
  %v1267 = vunpack.c.l.b16 %v1227
  %v1268 = vunpack.c.l.b16 %v1228
  %v1269 = vunpack.c.l.b16 %v1229
  %v1270 = vunpack.c.l.b16 %v1230
  %v1271 = vunpack.c.l.b16 %v1231
  %v1272 = vunpack.c.l.b16 %v1232
  %v1273 = vunpack.c.l.b16 %v1233
  %v1274 = vunpack.c.l.b16 %v1234
  %v1275 = vpack.c.b16 %v1260, %v1259
  %v1276 = vpack.c.b16 %v1262, %v1261
  %v1277 = vpack.c.b16 %v1264, %v1263
  %v1278 = vpack.c.b16 %v1266, %v1265
  %v1279 = vpack.c.b16 %v1268, %v1267
  %v1280 = vpack.c.b16 %v1270, %v1269
  %v1281 = vpack.c.b16 %v1272, %v1271
  %v1282 = vpack.c.b16 %v1274, %v1273
  %1291 = vmatprep.subr.bf16.mxu0 0
  %1292 = vmatpush1.bf16.msra.mxu0 %v1282
  %1293 = vmatprep.subr.bf16.mxu0 0
  %1294 = vmatpush1.bf16.msra.mxu0 %v1281
  %1295 = vmatprep.subr.bf16.mxu0 0
  %1296 = vmatpush1.bf16.msra.mxu0 %v1280
  %1297 = vmatprep.subr.bf16.mxu0 0
  %1298 = vmatpush1.bf16.msra.mxu0 %v1279
  %1299 = vmatprep.subr.bf16.mxu0 0
  %1300 = vmatpush1.bf16.msra.mxu0 %v1278
  %1301 = vmatprep.subr.bf16.mxu0 0
  %1302 = vmatpush1.bf16.msra.mxu0 %v1277
  %1303 = vmatprep.subr.bf16.mxu0 0
  %1304 = vmatpush1.bf16.msra.mxu0 %v1276
  %1305 = vmatprep.subr.bf16.mxu0 0
  %1306 = vmatpush1.bf16.msra.mxu0 %v1275
  %1307 = vmatprep.subr.bf16.mxu0 0
  %1308 = vmatpush2.bf16.msra.mxu0 0
  %1309 = vmatprep.subr.bf16.mxu0 0
  %1310 = vmatpush2.bf16.msra.mxu0 0
  %1311 = vmatprep.subr.bf16.mxu0 0
  %1312 = vmatpush2.bf16.msra.mxu0 0
  %1313 = vmatprep.subr.bf16.mxu0 0
  %1314 = vmatpush2.bf16.msra.mxu0 0
  %1315 = vmatprep.subr.bf16.mxu0 0
  %1316 = vmatpush2.bf16.msra.mxu0 0
  %1317 = vmatprep.subr.bf16.mxu0 0
  %1318 = vmatpush2.bf16.msra.mxu0 0
  %1319 = vmatprep.subr.bf16.mxu0 0
  %1320 = vmatpush2.bf16.msra.mxu0 0
  %1321 = vmatprep.subr.bf16.mxu0 0
  %1322 = vmatpush2.bf16.msra.mxu0 0
  %1323 = vmatprep.mubr.bf16.mxu0 0
  %1324 = vmatmul.mubr.bf16.gmra.mxu0 %v1217
  %v1325 = vpop.f32.mrf.mxu0
  %v1326 = vadd.f32 %v1241, %v1325
  %v1327 = vpop.f32.mrf.mxu0
  %v1328 = vpop.f32.mrf.mxu0
  %v1329 = vadd.f32 %v1241, %v1328
  %v1330 = vpop.f32.mrf.mxu0
  %1331 = vdwg.mxu0
  %v1332 = vmul.f32 %v1326, %v1326
  %v1333 = vmul.f32 %v1329, %v1329
  %v1334 = vmul.f32 %v1326, %v1332
  %v1335 = vmul.f32 %v1329, %v1333
  %v1336 = vmul.f32 %v1334, 0.044715
  %v1337 = vmul.f32 %v1335, 0.044715
  %v1338 = vadd.f32 %v1326, %v1336
  %v1339 = vadd.f32 %v1329, %v1337
  %v1340 = vmul.f32 %v1338, 0.7978846
  %v1341 = vmul.f32 %v1339, 0.7978846
  %v1342 = vtanh.pop %v1340
  %v1343 = vtanh.pop %v1341
  %v1344 = vadd.f32 %v1342, 1.0
  %v1345 = vadd.f32 %v1343, 1.0
  %v1346 = vmul.f32 %v1344, 0.5
  %v1347 = vmul.f32 %v1345, 0.5
  %v1348 = vmul.f32 %v1326, %v1346
  %v1349 = vmul.f32 %v1329, %v1347
  %v1350 = vpack.c.bf16 %v1349, %v1348
  %s1351 = scalar_lea.vmem %s5, 256
  %v1352 = vld [vmem:[%s1351] sm:$0xf]
  %v1353 = vld [vmem:[%s1351 + $0x4] sm:$0xf]
  %v1354 = vld [vmem:[%s1351 + $0x8] sm:$0xf]
  %v1355 = vld [vmem:[%s1351 + $0xc] sm:$0xf]
  %v1356 = vld [vmem:[%s1351 + $0x10] sm:$0xf]
  %v1357 = vld [vmem:[%s1351 + $0x14] sm:$0xf]
  %v1358 = vld [vmem:[%s1351 + $0x18] sm:$0xf]
  %v1359 = vld [vmem:[%s1351 + $0x1c] sm:$0xf]
  %v1360 = vld [vmem:[%s1351 + $0x20] sm:$0xf]
  %v1361 = vld [vmem:[%s1351 + $0x24] sm:$0xf]
  %v1362 = vld [vmem:[%s1351 + $0x28] sm:$0xf]
  %v1363 = vld [vmem:[%s1351 + $0x2c] sm:$0xf]
  %v1364 = vld [vmem:[%s1351 + $0x30] sm:$0xf]
  %v1365 = vld [vmem:[%s1351 + $0x34] sm:$0xf]
  %v1366 = vld [vmem:[%s1351 + $0x38] sm:$0xf]
  %v1367 = vld [vmem:[%s1351 + $0x3c] sm:$0xf]
  %s1368 = scalar_lea.vmem %s6, 4
  %v1369 = vld [vmem:[%s1368] sm:$0x1]
  %v1371 = vlaneseq
  %v1372 = vshrl.u32 %v1371, 7
  %v1373 = vsub.s32 0, %v1372
  %v1374 = vrot.slane %v1369, %v1373
  %v1392 = vunpack.c.l.b16 %v1352
  %v1393 = vunpack.c.l.b16 %v1353
  %v1394 = vunpack.c.l.b16 %v1354
  %v1395 = vunpack.c.l.b16 %v1355
  %v1396 = vunpack.c.l.b16 %v1356
  %v1397 = vunpack.c.l.b16 %v1357
  %v1398 = vunpack.c.l.b16 %v1358
  %v1399 = vunpack.c.l.b16 %v1359
  %v1400 = vunpack.c.l.b16 %v1360
  %v1401 = vunpack.c.l.b16 %v1361
  %v1402 = vunpack.c.l.b16 %v1362
  %v1403 = vunpack.c.l.b16 %v1363
  %v1404 = vunpack.c.l.b16 %v1364
  %v1405 = vunpack.c.l.b16 %v1365
  %v1406 = vunpack.c.l.b16 %v1366
  %v1407 = vunpack.c.l.b16 %v1367
  %v1408 = vpack.c.b16 %v1393, %v1392
  %v1409 = vpack.c.b16 %v1395, %v1394
  %v1410 = vpack.c.b16 %v1397, %v1396
  %v1411 = vpack.c.b16 %v1399, %v1398
  %v1412 = vpack.c.b16 %v1401, %v1400
  %v1413 = vpack.c.b16 %v1403, %v1402
  %v1414 = vpack.c.b16 %v1405, %v1404
  %v1415 = vpack.c.b16 %v1407, %v1406
  %1424 = vmatprep.subr.bf16.mxu0 0
  %1425 = vmatpush1.bf16.msra.mxu0 %v1415
  %1426 = vmatprep.subr.bf16.mxu0 0
  %1427 = vmatpush1.bf16.msra.mxu0 %v1414
  %1428 = vmatprep.subr.bf16.mxu0 0
  %1429 = vmatpush1.bf16.msra.mxu0 %v1413
  %1430 = vmatprep.subr.bf16.mxu0 0
  %1431 = vmatpush1.bf16.msra.mxu0 %v1412
  %1432 = vmatprep.subr.bf16.mxu0 0
  %1433 = vmatpush1.bf16.msra.mxu0 %v1411
  %1434 = vmatprep.subr.bf16.mxu0 0
  %1435 = vmatpush1.bf16.msra.mxu0 %v1410
  %1436 = vmatprep.subr.bf16.mxu0 0
  %1437 = vmatpush1.bf16.msra.mxu0 %v1409
  %1438 = vmatprep.subr.bf16.mxu0 0
  %1439 = vmatpush1.bf16.msra.mxu0 %v1408
  %1440 = vmatprep.subr.bf16.mxu0 0
  %1441 = vmatpush2.bf16.msra.mxu0 0
  %1442 = vmatprep.subr.bf16.mxu0 0
  %1443 = vmatpush2.bf16.msra.mxu0 0
  %1444 = vmatprep.subr.bf16.mxu0 0
  %1445 = vmatpush2.bf16.msra.mxu0 0
  %1446 = vmatprep.subr.bf16.mxu0 0
  %1447 = vmatpush2.bf16.msra.mxu0 0
  %1448 = vmatprep.subr.bf16.mxu0 0
  %1449 = vmatpush2.bf16.msra.mxu0 0
  %1450 = vmatprep.subr.bf16.mxu0 0
  %1451 = vmatpush2.bf16.msra.mxu0 0
  %1452 = vmatprep.subr.bf16.mxu0 0
  %1453 = vmatpush2.bf16.msra.mxu0 0
  %1454 = vmatprep.subr.bf16.mxu0 0
  %1455 = vmatpush2.bf16.msra.mxu0 0
  %1456 = vmatprep.mubr.bf16.mxu0 0
  %1457 = vmatmul.mubr.bf16.gmra.mxu0 %v1350
  %v1458 = vpop.f32.mrf.mxu0
  %v1459 = vadd.f32 %v1374, %v1458
  %v1460 = vpop.f32.mrf.mxu0
  %v1461 = vpop.f32.mrf.mxu0
  %v1462 = vadd.f32 %v1374, %v1461
  %v1463 = vpop.f32.mrf.mxu0
  %1464 = vdwg.mxu0
  %v1465 = vadd.f32 %v1215, %v1459
  %v1466 = vadd.f32 %v1216, %v1462
  %v1467 = vpack.c.bf16 %v1466, %v1465
  %v1468 = vld [vmem:[%s7] sm:$0xff]
  %v1469 = vld [vmem:[%s7 + $0x8] sm:$0xff]
  %v1470 = vld [vmem:[%s7 + $0x10] sm:$0xff]
  %v1471 = vld [vmem:[%s7 + $0x18] sm:$0xff]
  %v1472 = vld [vmem:[%s7 + $0x20] sm:$0xff]
  %v1473 = vld [vmem:[%s7 + $0x28] sm:$0xff]
  %v1474 = vld [vmem:[%s7 + $0x30] sm:$0xff]
  %v1475 = vld [vmem:[%s7 + $0x38] sm:$0xff]
  %v1476 = vld [vmem:[%s7 + $0x40] sm:$0xff]
  %v1477 = vld [vmem:[%s7 + $0x48] sm:$0xff]
  %v1478 = vld [vmem:[%s7 + $0x50] sm:$0xff]
  %v1479 = vld [vmem:[%s7 + $0x58] sm:$0xff]
  %v1480 = vld [vmem:[%s7 + $0x60] sm:$0xff]
  %v1481 = vld [vmem:[%s7 + $0x68] sm:$0xff]
  %v1482 = vld [vmem:[%s7 + $0x70] sm:$0xff]
  %v1483 = vld [vmem:[%s7 + $0x78] sm:$0xff]
  %v1484 = vld [vmem:[%s8] sm:$0x3]
  %v1486 = vlaneseq
  %v1487 = vshrl.u32 %v1486, 7
  %v1488 = vsub.s32 0, %v1487
  %v1489 = vrot.slane %v1484, %v1488
  %v1490 = vlaneseq
  %v1491 = vshrl.u32 %v1490, 7
  %v1492 = vsub.s32 1, %v1491
  %v1493 = vrot.slane %v1484, %v1492
  %v1512 = vunpack.c.l.b16 %v1468
  %v1513 = vunpack.c.h.b16 %v1468
  %v1514 = vunpack.c.l.b16 %v1469
  %v1515 = vunpack.c.h.b16 %v1469
  %v1516 = vunpack.c.l.b16 %v1470
  %v1517 = vunpack.c.h.b16 %v1470
  %v1518 = vunpack.c.l.b16 %v1471
  %v1519 = vunpack.c.h.b16 %v1471
  %v1520 = vunpack.c.l.b16 %v1472
  %v1521 = vunpack.c.h.b16 %v1472
  %v1522 = vunpack.c.l.b16 %v1473
  %v1523 = vunpack.c.h.b16 %v1473
  %v1524 = vunpack.c.l.b16 %v1474
  %v1525 = vunpack.c.h.b16 %v1474
  %v1526 = vunpack.c.l.b16 %v1475
  %v1527 = vunpack.c.h.b16 %v1475
  %v1528 = vunpack.c.l.b16 %v1476
  %v1529 = vunpack.c.h.b16 %v1476
  %v1530 = vunpack.c.l.b16 %v1477
  %v1531 = vunpack.c.h.b16 %v1477
  %v1532 = vunpack.c.l.b16 %v1478
  %v1533 = vunpack.c.h.b16 %v1478
  %v1534 = vunpack.c.l.b16 %v1479
  %v1535 = vunpack.c.h.b16 %v1479
  %v1536 = vunpack.c.l.b16 %v1480
  %v1537 = vunpack.c.h.b16 %v1480
  %v1538 = vunpack.c.l.b16 %v1481
  %v1539 = vunpack.c.h.b16 %v1481
  %v1540 = vunpack.c.l.b16 %v1482
  %v1541 = vunpack.c.h.b16 %v1482
  %v1542 = vunpack.c.l.b16 %v1483
  %v1543 = vunpack.c.h.b16 %v1483
  %v1544 = vpack.c.b16 %v1514, %v1512
  %v1545 = vpack.c.b16 %v1515, %v1513
  %v1546 = vpack.c.b16 %v1518, %v1516
  %v1547 = vpack.c.b16 %v1519, %v1517
  %v1548 = vpack.c.b16 %v1522, %v1520
  %v1549 = vpack.c.b16 %v1523, %v1521
  %v1550 = vpack.c.b16 %v1526, %v1524
  %v1551 = vpack.c.b16 %v1527, %v1525
  %v1552 = vpack.c.b16 %v1530, %v1528
  %v1553 = vpack.c.b16 %v1531, %v1529
  %v1554 = vpack.c.b16 %v1534, %v1532
  %v1555 = vpack.c.b16 %v1535, %v1533
  %v1556 = vpack.c.b16 %v1538, %v1536
  %v1557 = vpack.c.b16 %v1539, %v1537
  %v1558 = vpack.c.b16 %v1542, %v1540
  %v1559 = vpack.c.b16 %v1543, %v1541
  %1576 = vmatprep.subr.bf16.mxu0 %v1559
  %1577 = vmatpush1.bf16.msra.mxu0 %v1558
  %1578 = vmatprep.subr.bf16.mxu0 %v1557
  %1579 = vmatpush1.bf16.msra.mxu0 %v1556
  %1580 = vmatprep.subr.bf16.mxu0 %v1555
  %1581 = vmatpush1.bf16.msra.mxu0 %v1554
  %1582 = vmatprep.subr.bf16.mxu0 %v1553
  %1583 = vmatpush1.bf16.msra.mxu0 %v1552
  %1584 = vmatprep.subr.bf16.mxu0 %v1551
  %1585 = vmatpush1.bf16.msra.mxu0 %v1550
  %1586 = vmatprep.subr.bf16.mxu0 %v1549
  %1587 = vmatpush1.bf16.msra.mxu0 %v1548
  %1588 = vmatprep.subr.bf16.mxu0 %v1547
  %1589 = vmatpush1.bf16.msra.mxu0 %v1546
  %1590 = vmatprep.subr.bf16.mxu0 %v1545
  %1591 = vmatpush1.bf16.msra.mxu0 %v1544
  %1592 = vmatprep.subr.bf16.mxu0 0
  %1593 = vmatpush2.bf16.msra.mxu0 0
  %1594 = vmatprep.subr.bf16.mxu0 0
  %1595 = vmatpush2.bf16.msra.mxu0 0
  %1596 = vmatprep.subr.bf16.mxu0 0
  %1597 = vmatpush2.bf16.msra.mxu0 0
  %1598 = vmatprep.subr.bf16.mxu0 0
  %1599 = vmatpush2.bf16.msra.mxu0 0
  %1600 = vmatprep.subr.bf16.mxu0 0
  %1601 = vmatpush2.bf16.msra.mxu0 0
  %1602 = vmatprep.subr.bf16.mxu0 0
  %1603 = vmatpush2.bf16.msra.mxu0 0
  %1604 = vmatprep.subr.bf16.mxu0 0
  %1605 = vmatpush2.bf16.msra.mxu0 0
  %1606 = vmatprep.subr.bf16.mxu0 0
  %1607 = vmatpush2.bf16.msra.mxu0 0
  %1608 = vmatprep.mubr.bf16.mxu0 0
  %1609 = vmatmul.mubr.bf16.gmra.mxu0 %v1467
  %v1610 = vpop.f32.mrf.mxu0
  %v1611 = vadd.f32 %v1489, %v1610
  %v1612 = vpop.f32.mrf.mxu0
  %v1613 = vadd.f32 %v1493, %v1612
  %v1614 = vpop.f32.mrf.mxu0
  %v1615 = vadd.f32 %v1489, %v1614
  %v1616 = vpop.f32.mrf.mxu0
  %v1617 = vadd.f32 %v1493, %v1616
  %1618 = vdwg.mxu0
  %1619 = vst [vmem:[%s9] sm:$0xff] %v1611
  %1620 = vst [vmem:[%s9 + $0x8] sm:$0xff] %v1613
  %1621 = vst [vmem:[%s9 + $0x10] sm:$0xff] %v1615
  %1622 = vst [vmem:[%s9 + $0x18] sm:$0xff] %v1617
  // Predicated region
  $region38: #{decoder_forward.1} parent=0 // pred_check
    _
  $region39: #{decoder_forward.1} parent=0 // pred_check_branch
    %1624 = sbr.rel (0) target = $region41
  $region40: #{decoder_forward.1} parent=0 // pred_region
    _
  $region41: #{decoder_forward.1} parent=0 // pred_fallthru
    _
  // Predicated region
  $region42: #{decoder_forward.1} parent=0 // pred_check
    _
  $region43: #{decoder_forward.1} parent=0 // pred_check_branch
    %1626 = sbr.rel (0) target = $region45
  $region44: #{decoder_forward.1} parent=0 // pred_region
    _
  $region45: #{decoder_forward.1} parent=0 // pred_fallthru
    _

</llo_original>
